<compile_context>
chip_gen: v6e
topology: v6e:2x2x1
jax: 0.10.0
libtpu: 0.0.40
codegen_flags: <defaults>
</compile_context>

<pallas_src>
import functools

import jax
import jax.numpy as jnp
from jax import lax
from jax.experimental import pallas as pl
from jax.experimental.pallas import tpu as pltpu

KH = KW = 4
STRIDE = 2
PAD = 1
EPS = 1e-5  # torch.nn.InstanceNorm2d default


def _down_kernel(x_ref, w_ref, o_ref, sum_ref, sq_ref, *, row_tile, wo, inv_p):
    """One (batch, cout-group, row-tile) grid step.

    x_ref  : (Hq, C4, Wq)      bf16  space-to-depth padded input, resident per instance
    w_ref  : (Cout_t, 4*C4)    bf16  K-concatenated conv weight for this Cout group
    o_ref  : (Ho, Cout_t, Wo)  out dtype; per-(instance, group) block resident across
                               row tiles (accumulator pattern), DMA'd once to HBM
    sum_ref, sq_ref : (Cout_t, Wo) f32 scratch -- lane-wide running sum / sum-of-squares
    """
    pt = pl.program_id(2)
    n_pt = pl.num_programs(2)

    @pl.when(pt == 0)
    def _init_stats():
        sum_ref[...] = jnp.zeros_like(sum_ref)
        sq_ref[...] = jnp.zeros_like(sq_ref)

    wcat = w_ref[...]                                    # (Cout_t, 4*C4) bf16
    i0 = pl.multiple_of(pt * row_tile, row_tile)

    def row_body(r, carry):
        top = x_ref[i0 + r]                              # (C4, Wq) bf16
        bot = x_ref[i0 + r + 1]                          # (C4, Wq) bf16
        # K-concatenated operand: order (dh, dw) = (0,0), (0,1), (1,0), (1,1)
        # matches the wrapper's weight layout.  Single K=4*C4 matmul per row.
        xk = jnp.concatenate(
            [top[:, :wo], top[:, 1:], bot[:, :wo], bot[:, 1:]], axis=0)  # (4*C4, Wo)
        # Conv bias intentionally omitted: cancelled by InstanceNorm mean subtraction.
        acc = jnp.dot(wcat, xk, preferred_element_type=jnp.float32)      # (Cout_t, Wo)
        o_ref[i0 + r] = acc.astype(o_ref.dtype)          # raw (pre-norm) conv output row
        # Lane-wide stats straight from the in-register acc (free VPU filler under MXU).
        sum_ref[...] += acc
        sq_ref[...] += acc * acc
        return carry

    lax.fori_loop(0, row_tile, row_body, 0, unroll=True)

    # Last row tile of this (instance, group): normalize + ReLU the resident block.
    @pl.when(pt == n_pt - 1)
    def _finalize():
        s1 = jnp.sum(sum_ref[...], axis=1, keepdims=True)    # (Cout_t, 1) single XLU reduce
        s2 = jnp.sum(sq_ref[...], axis=1, keepdims=True)
        mean = s1 * inv_p
        var = jnp.maximum(s2 * inv_p - mean * mean, 0.0)     # biased, like InstanceNorm2d
        inv = lax.rsqrt(var + EPS)
        y = o_ref[...].astype(jnp.float32)                   # (Ho, Cout_t, Wo)
        o_ref[...] = jnp.maximum((y - mean[None]) * inv[None], 0.0).astype(o_ref.dtype)


def down_forward(x, weight, bias=None, *, row_tile=8, cout_tile=None,
                 out_dtype=jnp.float32, nchw_output=True):
    """Forward of Down: Conv2d(Cin->Cout, k=4, s=2, p=1) -> InstanceNorm2d -> ReLU.

    x: (N, Cin, H, W) float32 (NCHW, like the PyTorch module)
    weight: (Cout, Cin, 4, 4); bias: (Cout,) accepted for API parity but unused
    (a per-channel constant is exactly removed by InstanceNorm(affine=False)).
    Returns (N, Cout, H//2, W//2) in `out_dtype` (NCHW if nchw_output, else kernel-native
    (N, Ho, Cout, Wo)).
    """
    del bias  # mathematically a no-op before InstanceNorm(affine=False)
    n, cin, h, w = x.shape
    cout = weight.shape[0]
    assert h % 2 == 0 and w % 2 == 0, "k=4/s=2/p=1 Down expects even H, W"
    ho, wo = h // 2, w // 2
    hq, wq = ho + 1, wo + 1
    c4 = 4 * cin

    # ---- wrapper glue (no data expansion): pad + space-to-depth ----
    # xs[n, i, (p*2 + q)*Cin + c, j] = x_pad[n, c, 2*i + p, 2*j + q]
    xp = jnp.pad(x, ((0, 0), (0, 0), (PAD, PAD), (PAD, PAD)))
    xs = xp.reshape(n, cin, hq, 2, wq, 2)
    xs = jnp.transpose(xs, (0, 2, 3, 5, 1, 4)).reshape(n, hq, c4, wq)
    xs = xs.astype(jnp.bfloat16)                       # MXU-native, halves input DMA

    # wcat[co, (dh*2+dw)*C4 + (p*2+q)*Cin + c] = weight[co, c, 2*dh+p, 2*dw+q]
    wcat = weight.reshape(cout, cin, 2, 2, 2, 2)       # (cout, cin, dh, p, dw, q)
    wcat = jnp.transpose(wcat, (0, 2, 4, 3, 5, 1)).reshape(cout, 4 * c4)
    wcat = wcat.astype(jnp.bfloat16)

    # Cout groups: per-channel stats -> no cross-group reduction needed.  On v7x pass
    # cout_tile=cout//2 (or rely on the default split) for 2-TC use with batch=1.
    if cout_tile is None:
        cout_tile = 128 if (cout > 128 and cout % 128 == 0) else cout
    assert cout % cout_tile == 0
    n_cg = cout // cout_tile

    # Largest row tile that divides Ho (avoids the whole-instance-unroll fallback).
    th = min(max(int(row_tile), 1), ho)
    while ho % th:
        th -= 1
    n_pt = ho // th

    # Scoped-VMEM budget: double-buffered input + output blocks, weights, stats, margin.
    out_itemsize = jnp.dtype(out_dtype).itemsize
    vmem_need = (2 * hq * c4 * wq * 2
                 + 2 * ho * cout_tile * wo * out_itemsize
                 + 2 * cout_tile * 4 * c4 * 2
                 + 2 * cout_tile * wo * 4
                 + (4 << 20))
    vmem_limit = int(min(max(vmem_need, 32 << 20), 128 << 20))

    kernel = functools.partial(
        _down_kernel, row_tile=th, wo=wo, inv_p=1.0 / float(ho * wo))

    out = pl.pallas_call(
        kernel,
        out_shape=jax.ShapeDtypeStruct((n, ho, cout, wo), out_dtype),
        grid_spec=pltpu.PrefetchScalarGridSpec(
            num_scalar_prefetch=0,
            grid=(n, n_cg, n_pt),
            in_specs=[
                # whole padded instance, resident across the cout-group and row-tile axes
                pl.BlockSpec((None, hq, c4, wq), lambda b, g, p: (b, 0, 0, 0)),
                pl.BlockSpec((cout_tile, 4 * c4), lambda b, g, p: (g, 0)),
            ],
            # per-(instance, group) output block resident across row tiles (accumulator);
            # DMA'd to HBM once, after the finalize step.
            out_specs=pl.BlockSpec((None, ho, cout_tile, wo),
                                   lambda b, g, p: (b, 0, g, 0)),
            scratch_shapes=[
                pltpu.VMEM((cout_tile, wo), jnp.float32),   # per-channel lane-wide sum
                pltpu.VMEM((cout_tile, wo), jnp.float32),   # per-channel lane-wide sum sq
            ],
        ),
        compiler_params=pltpu.CompilerParams(
            dimension_semantics=("parallel", "parallel", "arbitrary"),
            vmem_limit_bytes=vmem_limit,
        ),
    )(xs, wcat)

    if nchw_output:
        # TODO(synk): in a fused multi-layer pipeline keep the kernel-native
        # (N, Ho, Cout, Wo) layout (nchw_output=False) and fold this permute into the
        # next layer's input BlockSpec to save an output-sized HBM round trip.
        out = jnp.transpose(out, (0, 2, 1, 3))
    return out


def _reference(x, weight, bias):
    """Pure-JAX f32 reference matching the PyTorch module (bias included)."""
    y = lax.conv_general_dilated(
        x, weight, window_strides=(STRIDE, STRIDE),
        padding=((PAD, PAD), (PAD, PAD)),
        dimension_numbers=("NCHW", "OIHW", "NCHW"))
    y = y + bias[None, :, None, None]
    mean = jnp.mean(y, axis=(2, 3), keepdims=True)
    var = jnp.var(y, axis=(2, 3), keepdims=True)       # biased, like InstanceNorm2d
    return jnp.maximum((y - mean) * lax.rsqrt(var + EPS), 0.0)


if __name__ == "__main__":
    N, CIN, H, W = 2, 4, 16, 16
    COUT = 8

    key = jax.random.PRNGKey(0)
    kx, kw, kb = jax.random.split(key, 3)
    x = jax.random.normal(kx, (N, CIN, H, W), dtype=jnp.float32)
    fan_in = CIN * KH * KW
    bound = 1.0 / (fan_in ** 0.5)
    weight = jax.random.uniform(kw, (COUT, CIN, KH, KW), jnp.float32, -bound, bound)
    bias = jax.random.uniform(kb, (COUT,), jnp.float32, -bound, bound)

    y = down_forward(x, weight, bias)
    jax.block_until_ready(y)

    assert y.shape == (N, COUT, H // 2, W // 2)
    assert bool(jnp.all(y >= 0.0))  # ReLU output

    # Reference includes the conv bias; the kernel drops it (cancelled by InstanceNorm),
    # so agreement also validates that simplification.  bf16 matmul -> loose tolerance.
    y_ref = _reference(x, weight, bias)
    max_err = float(jnp.max(jnp.abs(y - y_ref)))
    assert max_err < 0.1, f"max abs err vs reference: {max_err}"

    print("KERNEL_OK")
</pallas_src>

<mosaic_0001>
module attributes {stable_mosaic.version = 11 : i64} {
  func.func @_down_kernel(%arg0: i32, %arg1: i32, %arg2: i32, %arg3: memref<1x9x16x9xbf16, #tpu.memory_space<vmem>>, %arg4: memref<8x64xbf16, #tpu.memory_space<vmem>>, %arg5: memref<1x8x8x8xf32, #tpu.memory_space<vmem>>, %arg6: memref<8x8xf32, #tpu.memory_space<vmem>>, %arg7: memref<8x8xf32, #tpu.memory_space<vmem>>) attributes {dimension_semantics = [#tpu.dimension_semantics<parallel>, #tpu.dimension_semantics<parallel>, #tpu.dimension_semantics<arbitrary>], iteration_bounds = array<i64: 2, 1, 1>, scalar_prefetch = 0 : i64, scratch_operands = 2 : i64, tpu.core_type = #tpu.core_type<tc>, window_params = [{transform_indices = @transform_0, window_bounds = array<i64: 1, 9, 16, 9>}, {transform_indices = @transform_1, window_bounds = array<i64: 8, 64>}, {transform_indices = @transform_2, window_bounds = array<i64: 1, 8, 8, 8>}]} {
    %c0_i32 = arith.constant 0 : i32
    %0 = arith.cmpi eq, %arg2, %c0_i32 : i32
    %1 = arith.extui %0 : i1 to i32
    %c0_i32_0 = arith.constant 0 : i32
    %2 = arith.cmpi ne, %1, %c0_i32_0 : i32
    scf.if %2 {
      %cst_157 = arith.constant 0.000000e+00 : f32
      %225 = vector.broadcast %cst_157 : f32 to vector<8x8xf32>
      %c0_158 = arith.constant 0 : index
      %c0_159 = arith.constant 0 : index
      %226 = vector.load %arg6[%c0_158, %c0_159] : memref<8x8xf32, #tpu.memory_space<vmem>>, vector<8x8xf32>
      tpu.vector_store %arg6[%c0_158, %c0_159], %225 {strides = array<i32>} : memref<8x8xf32, #tpu.memory_space<vmem>>, vector<8x8xf32>,
      %cst_160 = arith.constant 0.000000e+00 : f32
      %227 = vector.broadcast %cst_160 : f32 to vector<8x8xf32>
      %c0_161 = arith.constant 0 : index
      %c0_162 = arith.constant 0 : index
      %228 = vector.load %arg7[%c0_161, %c0_162] : memref<8x8xf32, #tpu.memory_space<vmem>>, vector<8x8xf32>
      tpu.vector_store %arg7[%c0_161, %c0_162], %227 {strides = array<i32>} : memref<8x8xf32, #tpu.memory_space<vmem>>, vector<8x8xf32>,
    } else {
    }
    %c0 = arith.constant 0 : index
    %c0_1 = arith.constant 0 : index
    %3 = vector.load %arg4[%c0, %c0_1] : memref<8x64xbf16, #tpu.memory_space<vmem>>, vector<8x64xbf16>
    %c8_i32 = arith.constant 8 : i32
    %4 = arith.muli %arg2, %c8_i32 : i32
    %5 = tpu.assume_multiple %4, 8 : i32
    %c0_i32_2 = arith.constant 0 : i32
    %6 = arith.addi %5, %c0_i32_2 : i32
    %c0_3 = arith.constant 0 : index
    %7 = arith.index_cast %6 : i32 to index
    %c0_4 = arith.constant 0 : index
    %c0_5 = arith.constant 0 : index
    %8 = vector.load %arg3[%c0_3, %7, %c0_4, %c0_5] : memref<1x9x16x9xbf16, #tpu.memory_space<vmem>>, vector<1x1x16x9xbf16>
    %9 = vector.shape_cast %8 : vector<1x1x16x9xbf16> to vector<16x9xbf16>
    %10 = arith.addi %5, %c0_i32_2 : i32
    %c1_i32 = arith.constant 1 : i32
    %11 = arith.addi %10, %c1_i32 : i32
    %c0_6 = arith.constant 0 : index
    %12 = arith.index_cast %11 : i32 to index
    %c0_7 = arith.constant 0 : index
    %c0_8 = arith.constant 0 : index
    %13 = vector.load %arg3[%c0_6, %12, %c0_7, %c0_8] : memref<1x9x16x9xbf16, #tpu.memory_space<vmem>>, vector<1x1x16x9xbf16>
    %14 = vector.shape_cast %13 : vector<1x1x16x9xbf16> to vector<16x9xbf16>
    %15 = vector.extract_strided_slice %9 {offsets = [0, 0], sizes = [16, 8], strides = [1, 1]} : vector<16x9xbf16> to vector<16x8xbf16>
    %16 = vector.extract_strided_slice %9 {offsets = [0, 1], sizes = [16, 8], strides = [1, 1]} : vector<16x9xbf16> to vector<16x8xbf16>
    %17 = vector.extract_strided_slice %14 {offsets = [0, 0], sizes = [16, 8], strides = [1, 1]} : vector<16x9xbf16> to vector<16x8xbf16>
    %18 = vector.extract_strided_slice %14 {offsets = [0, 1], sizes = [16, 8], strides = [1, 1]} : vector<16x9xbf16> to vector<16x8xbf16>
    %19 = tpu.concatenate %15, %16, %17, %18 in 0 : vector<16x8xbf16>, vector<16x8xbf16>, vector<16x8xbf16>, vector<16x8xbf16> -> vector<64x8xbf16>
    %cst = arith.constant dense<0.000000e+00> : vector<8x8xf32>
    %20 = tpu.matmul %3, %19, %cst {dimension_numbers = #tpu.dot_dimension_numbers<[1], [0], [0], [1], [0, 0, 1, 1], [], []>} : vector<8x64xbf16>, vector<64x8xbf16>, vector<8x8xf32> -> vector<8x8xf32>
    %21 = arith.addi %5, %c0_i32_2 : i32
    %c0_9 = arith.constant 0 : index
    %22 = arith.index_cast %21 : i32 to index
    %c0_10 = arith.constant 0 : index
    %c0_11 = arith.constant 0 : index
    %23 = vector.load %arg5[%c0_9, %22, %c0_10, %c0_11] : memref<1x8x8x8xf32, #tpu.memory_space<vmem>>, vector<1x1x8x8xf32>
    %24 = vector.shape_cast %23 : vector<1x1x8x8xf32> to vector<8x8xf32>
    %25 = vector.shape_cast %20 : vector<8x8xf32> to vector<1x1x8x8xf32>
    tpu.vector_store %arg5[%c0_9, %22, %c0_10, %c0_11], %25 {strides = array<i32>} : memref<1x8x8x8xf32, #tpu.memory_space<vmem>>, vector<1x1x8x8xf32>,
    %c0_12 = arith.constant 0 : index
    %c0_13 = arith.constant 0 : index
    %26 = vector.load %arg6[%c0_12, %c0_13] : memref<8x8xf32, #tpu.memory_space<vmem>>, vector<8x8xf32>
    %27 = arith.addf %26, %20 : vector<8x8xf32>
    %c0_14 = arith.constant 0 : index
    %c0_15 = arith.constant 0 : index
    %28 = vector.load %arg6[%c0_14, %c0_15] : memref<8x8xf32, #tpu.memory_space<vmem>>, vector<8x8xf32>
    tpu.vector_store %arg6[%c0_14, %c0_15], %27 {strides = array<i32>} : memref<8x8xf32, #tpu.memory_space<vmem>>, vector<8x8xf32>,
    %c0_16 = arith.constant 0 : index
    %c0_17 = arith.constant 0 : index
    %29 = vector.load %arg7[%c0_16, %c0_17] : memref<8x8xf32, #tpu.memory_space<vmem>>, vector<8x8xf32>
    %30 = arith.mulf %20, %20 : vector<8x8xf32>
    %31 = arith.addf %29, %30 : vector<8x8xf32>
    %c0_18 = arith.constant 0 : index
    %c0_19 = arith.constant 0 : index
    %32 = vector.load %arg7[%c0_18, %c0_19] : memref<8x8xf32, #tpu.memory_space<vmem>>, vector<8x8xf32>
    tpu.vector_store %arg7[%c0_18, %c0_19], %31 {strides = array<i32>} : memref<8x8xf32, #tpu.memory_space<vmem>>, vector<8x8xf32>,
    %c1_i32_20 = arith.constant 1 : i32
    %33 = arith.addi %5, %c1_i32_20 : i32
    %c0_21 = arith.constant 0 : index
    %34 = arith.index_cast %33 : i32 to index
    %c0_22 = arith.constant 0 : index
    %c0_23 = arith.constant 0 : index
    %35 = vector.load %arg3[%c0_21, %34, %c0_22, %c0_23] : memref<1x9x16x9xbf16, #tpu.memory_space<vmem>>, vector<1x1x16x9xbf16>
    %36 = vector.shape_cast %35 : vector<1x1x16x9xbf16> to vector<16x9xbf16>
    %37 = arith.addi %5, %c1_i32_20 : i32
    %c1_i32_24 = arith.constant 1 : i32
    %38 = arith.addi %37, %c1_i32_24 : i32
    %c0_25 = arith.constant 0 : index
    %39 = arith.index_cast %38 : i32 to index
    %c0_26 = arith.constant 0 : index
    %c0_27 = arith.constant 0 : index
    %40 = vector.load %arg3[%c0_25, %39, %c0_26, %c0_27] : memref<1x9x16x9xbf16, #tpu.memory_space<vmem>>, vector<1x1x16x9xbf16>
    %41 = vector.shape_cast %40 : vector<1x1x16x9xbf16> to vector<16x9xbf16>
    %42 = vector.extract_strided_slice %36 {offsets = [0, 0], sizes = [16, 8], strides = [1, 1]} : vector<16x9xbf16> to vector<16x8xbf16>
    %43 = vector.extract_strided_slice %36 {offsets = [0, 1], sizes = [16, 8], strides = [1, 1]} : vector<16x9xbf16> to vector<16x8xbf16>
    %44 = vector.extract_strided_slice %41 {offsets = [0, 0], sizes = [16, 8], strides = [1, 1]} : vector<16x9xbf16> to vector<16x8xbf16>
    %45 = vector.extract_strided_slice %41 {offsets = [0, 1], sizes = [16, 8], strides = [1, 1]} : vector<16x9xbf16> to vector<16x8xbf16>
    %46 = tpu.concatenate %42, %43, %44, %45 in 0 : vector<16x8xbf16>, vector<16x8xbf16>, vector<16x8xbf16>, vector<16x8xbf16> -> vector<64x8xbf16>
    %cst_28 = arith.constant dense<0.000000e+00> : vector<8x8xf32>
    %47 = tpu.matmul %3, %46, %cst_28 {dimension_numbers = #tpu.dot_dimension_numbers<[1], [0], [0], [1], [0, 0, 1, 1], [], []>} : vector<8x64xbf16>, vector<64x8xbf16>, vector<8x8xf32> -> vector<8x8xf32>
    %48 = arith.addi %5, %c1_i32_20 : i32
    %c0_29 = arith.constant 0 : index
    %49 = arith.index_cast %48 : i32 to index
    %c0_30 = arith.constant 0 : index
    %c0_31 = arith.constant 0 : index
    %50 = vector.load %arg5[%c0_29, %49, %c0_30, %c0_31] : memref<1x8x8x8xf32, #tpu.memory_space<vmem>>, vector<1x1x8x8xf32>
    %51 = vector.shape_cast %50 : vector<1x1x8x8xf32> to vector<8x8xf32>
    %52 = vector.shape_cast %47 : vector<8x8xf32> to vector<1x1x8x8xf32>
    tpu.vector_store %arg5[%c0_29, %49, %c0_30, %c0_31], %52 {strides = array<i32>} : memref<1x8x8x8xf32, #tpu.memory_space<vmem>>, vector<1x1x8x8xf32>,
    %c0_32 = arith.constant 0 : index
    %c0_33 = arith.constant 0 : index
    %53 = vector.load %arg6[%c0_32, %c0_33] : memref<8x8xf32, #tpu.memory_space<vmem>>, vector<8x8xf32>
    %54 = arith.addf %53, %47 : vector<8x8xf32>
    %c0_34 = arith.constant 0 : index
    %c0_35 = arith.constant 0 : index
    %55 = vector.load %arg6[%c0_34, %c0_35] : memref<8x8xf32, #tpu.memory_space<vmem>>, vector<8x8xf32>
    tpu.vector_store %arg6[%c0_34, %c0_35], %54 {strides = array<i32>} : memref<8x8xf32, #tpu.memory_space<vmem>>, vector<8x8xf32>,
    %c0_36 = arith.constant 0 : index
    %c0_37 = arith.constant 0 : index
    %56 = vector.load %arg7[%c0_36, %c0_37] : memref<8x8xf32, #tpu.memory_space<vmem>>, vector<8x8xf32>
    %57 = arith.mulf %47, %47 : vector<8x8xf32>
    %58 = arith.addf %56, %57 : vector<8x8xf32>
    %c0_38 = arith.constant 0 : index
    %c0_39 = arith.constant 0 : index
    %59 = vector.load %arg7[%c0_38, %c0_39] : memref<8x8xf32, #tpu.memory_space<vmem>>, vector<8x8xf32>
    tpu.vector_store %arg7[%c0_38, %c0_39], %58 {strides = array<i32>} : memref<8x8xf32, #tpu.memory_space<vmem>>, vector<8x8xf32>,
    %c2_i32 = arith.constant 2 : i32
    %60 = arith.addi %5, %c2_i32 : i32
    %c0_40 = arith.constant 0 : index
    %61 = arith.index_cast %60 : i32 to index
    %c0_41 = arith.constant 0 : index
    %c0_42 = arith.constant 0 : index
    %62 = vector.load %arg3[%c0_40, %61, %c0_41, %c0_42] : memref<1x9x16x9xbf16, #tpu.memory_space<vmem>>, vector<1x1x16x9xbf16>
    %63 = vector.shape_cast %62 : vector<1x1x16x9xbf16> to vector<16x9xbf16>
    %64 = arith.addi %5, %c2_i32 : i32
    %c1_i32_43 = arith.constant 1 : i32
    %65 = arith.addi %64, %c1_i32_43 : i32
    %c0_44 = arith.constant 0 : index
    %66 = arith.index_cast %65 : i32 to index
    %c0_45 = arith.constant 0 : index
    %c0_46 = arith.constant 0 : index
    %67 = vector.load %arg3[%c0_44, %66, %c0_45, %c0_46] : memref<1x9x16x9xbf16, #tpu.memory_space<vmem>>, vector<1x1x16x9xbf16>
    %68 = vector.shape_cast %67 : vector<1x1x16x9xbf16> to vector<16x9xbf16>
    %69 = vector.extract_strided_slice %63 {offsets = [0, 0], sizes = [16, 8], strides = [1, 1]} : vector<16x9xbf16> to vector<16x8xbf16>
    %70 = vector.extract_strided_slice %63 {offsets = [0, 1], sizes = [16, 8], strides = [1, 1]} : vector<16x9xbf16> to vector<16x8xbf16>
    %71 = vector.extract_strided_slice %68 {offsets = [0, 0], sizes = [16, 8], strides = [1, 1]} : vector<16x9xbf16> to vector<16x8xbf16>
    %72 = vector.extract_strided_slice %68 {offsets = [0, 1], sizes = [16, 8], strides = [1, 1]} : vector<16x9xbf16> to vector<16x8xbf16>
    %73 = tpu.concatenate %69, %70, %71, %72 in 0 : vector<16x8xbf16>, vector<16x8xbf16>, vector<16x8xbf16>, vector<16x8xbf16> -> vector<64x8xbf16>
    %cst_47 = arith.constant dense<0.000000e+00> : vector<8x8xf32>
    %74 = tpu.matmul %3, %73, %cst_47 {dimension_numbers = #tpu.dot_dimension_numbers<[1], [0], [0], [1], [0, 0, 1, 1], [], []>} : vector<8x64xbf16>, vector<64x8xbf16>, vector<8x8xf32> -> vector<8x8xf32>
    %75 = arith.addi %5, %c2_i32 : i32
    %c0_48 = arith.constant 0 : index
    %76 = arith.index_cast %75 : i32 to index
    %c0_49 = arith.constant 0 : index
    %c0_50 = arith.constant 0 : index
    %77 = vector.load %arg5[%c0_48, %76, %c0_49, %c0_50] : memref<1x8x8x8xf32, #tpu.memory_space<vmem>>, vector<1x1x8x8xf32>
    %78 = vector.shape_cast %77 : vector<1x1x8x8xf32> to vector<8x8xf32>
    %79 = vector.shape_cast %74 : vector<8x8xf32> to vector<1x1x8x8xf32>
    tpu.vector_store %arg5[%c0_48, %76, %c0_49, %c0_50], %79 {strides = array<i32>} : memref<1x8x8x8xf32, #tpu.memory_space<vmem>>, vector<1x1x8x8xf32>,
    %c0_51 = arith.constant 0 : index
    %c0_52 = arith.constant 0 : index
    %80 = vector.load %arg6[%c0_51, %c0_52] : memref<8x8xf32, #tpu.memory_space<vmem>>, vector<8x8xf32>
    %81 = arith.addf %80, %74 : vector<8x8xf32>
    %c0_53 = arith.constant 0 : index
    %c0_54 = arith.constant 0 : index
    %82 = vector.load %arg6[%c0_53, %c0_54] : memref<8x8xf32, #tpu.memory_space<vmem>>, vector<8x8xf32>
    tpu.vector_store %arg6[%c0_53, %c0_54], %81 {strides = array<i32>} : memref<8x8xf32, #tpu.memory_space<vmem>>, vector<8x8xf32>,
    %c0_55 = arith.constant 0 : index
    %c0_56 = arith.constant 0 : index
    %83 = vector.load %arg7[%c0_55, %c0_56] : memref<8x8xf32, #tpu.memory_space<vmem>>, vector<8x8xf32>
    %84 = arith.mulf %74, %74 : vector<8x8xf32>
    %85 = arith.addf %83, %84 : vector<8x8xf32>
    %c0_57 = arith.constant 0 : index
    %c0_58 = arith.constant 0 : index
    %86 = vector.load %arg7[%c0_57, %c0_58] : memref<8x8xf32, #tpu.memory_space<vmem>>, vector<8x8xf32>
    tpu.vector_store %arg7[%c0_57, %c0_58], %85 {strides = array<i32>} : memref<8x8xf32, #tpu.memory_space<vmem>>, vector<8x8xf32>,
    %c3_i32 = arith.constant 3 : i32
    %87 = arith.addi %5, %c3_i32 : i32
    %c0_59 = arith.constant 0 : index
    %88 = arith.index_cast %87 : i32 to index
    %c0_60 = arith.constant 0 : index
    %c0_61 = arith.constant 0 : index
    %89 = vector.load %arg3[%c0_59, %88, %c0_60, %c0_61] : memref<1x9x16x9xbf16, #tpu.memory_space<vmem>>, vector<1x1x16x9xbf16>
    %90 = vector.shape_cast %89 : vector<1x1x16x9xbf16> to vector<16x9xbf16>
    %91 = arith.addi %5, %c3_i32 : i32
    %c1_i32_62 = arith.constant 1 : i32
    %92 = arith.addi %91, %c1_i32_62 : i32
    %c0_63 = arith.constant 0 : index
    %93 = arith.index_cast %92 : i32 to index
    %c0_64 = arith.constant 0 : index
    %c0_65 = arith.constant 0 : index
    %94 = vector.load %arg3[%c0_63, %93, %c0_64, %c0_65] : memref<1x9x16x9xbf16, #tpu.memory_space<vmem>>, vector<1x1x16x9xbf16>
    %95 = vector.shape_cast %94 : vector<1x1x16x9xbf16> to vector<16x9xbf16>
    %96 = vector.extract_strided_slice %90 {offsets = [0, 0], sizes = [16, 8], strides = [1, 1]} : vector<16x9xbf16> to vector<16x8xbf16>
    %97 = vector.extract_strided_slice %90 {offsets = [0, 1], sizes = [16, 8], strides = [1, 1]} : vector<16x9xbf16> to vector<16x8xbf16>
    %98 = vector.extract_strided_slice %95 {offsets = [0, 0], sizes = [16, 8], strides = [1, 1]} : vector<16x9xbf16> to vector<16x8xbf16>
    %99 = vector.extract_strided_slice %95 {offsets = [0, 1], sizes = [16, 8], strides = [1, 1]} : vector<16x9xbf16> to vector<16x8xbf16>
    %100 = tpu.concatenate %96, %97, %98, %99 in 0 : vector<16x8xbf16>, vector<16x8xbf16>, vector<16x8xbf16>, vector<16x8xbf16> -> vector<64x8xbf16>
    %cst_66 = arith.constant dense<0.000000e+00> : vector<8x8xf32>
    %101 = tpu.matmul %3, %100, %cst_66 {dimension_numbers = #tpu.dot_dimension_numbers<[1], [0], [0], [1], [0, 0, 1, 1], [], []>} : vector<8x64xbf16>, vector<64x8xbf16>, vector<8x8xf32> -> vector<8x8xf32>
    %102 = arith.addi %5, %c3_i32 : i32
    %c0_67 = arith.constant 0 : index
    %103 = arith.index_cast %102 : i32 to index
    %c0_68 = arith.constant 0 : index
    %c0_69 = arith.constant 0 : index
    %104 = vector.load %arg5[%c0_67, %103, %c0_68, %c0_69] : memref<1x8x8x8xf32, #tpu.memory_space<vmem>>, vector<1x1x8x8xf32>
    %105 = vector.shape_cast %104 : vector<1x1x8x8xf32> to vector<8x8xf32>
    %106 = vector.shape_cast %101 : vector<8x8xf32> to vector<1x1x8x8xf32>
    tpu.vector_store %arg5[%c0_67, %103, %c0_68, %c0_69], %106 {strides = array<i32>} : memref<1x8x8x8xf32, #tpu.memory_space<vmem>>, vector<1x1x8x8xf32>,
    %c0_70 = arith.constant 0 : index
    %c0_71 = arith.constant 0 : index
    %107 = vector.load %arg6[%c0_70, %c0_71] : memref<8x8xf32, #tpu.memory_space<vmem>>, vector<8x8xf32>
    %108 = arith.addf %107, %101 : vector<8x8xf32>
    %c0_72 = arith.constant 0 : index
    %c0_73 = arith.constant 0 : index
    %109 = vector.load %arg6[%c0_72, %c0_73] : memref<8x8xf32, #tpu.memory_space<vmem>>, vector<8x8xf32>
    tpu.vector_store %arg6[%c0_72, %c0_73], %108 {strides = array<i32>} : memref<8x8xf32, #tpu.memory_space<vmem>>, vector<8x8xf32>,
    %c0_74 = arith.constant 0 : index
    %c0_75 = arith.constant 0 : index
    %110 = vector.load %arg7[%c0_74, %c0_75] : memref<8x8xf32, #tpu.memory_space<vmem>>, vector<8x8xf32>
    %111 = arith.mulf %101, %101 : vector<8x8xf32>
    %112 = arith.addf %110, %111 : vector<8x8xf32>
    %c0_76 = arith.constant 0 : index
    %c0_77 = arith.constant 0 : index
    %113 = vector.load %arg7[%c0_76, %c0_77] : memref<8x8xf32, #tpu.memory_space<vmem>>, vector<8x8xf32>
    tpu.vector_store %arg7[%c0_76, %c0_77], %112 {strides = array<i32>} : memref<8x8xf32, #tpu.memory_space<vmem>>, vector<8x8xf32>,
    %c4_i32 = arith.constant 4 : i32
    %114 = arith.addi %5, %c4_i32 : i32
    %c0_78 = arith.constant 0 : index
    %115 = arith.index_cast %114 : i32 to index
    %c0_79 = arith.constant 0 : index
    %c0_80 = arith.constant 0 : index
    %116 = vector.load %arg3[%c0_78, %115, %c0_79, %c0_80] : memref<1x9x16x9xbf16, #tpu.memory_space<vmem>>, vector<1x1x16x9xbf16>
    %117 = vector.shape_cast %116 : vector<1x1x16x9xbf16> to vector<16x9xbf16>
    %118 = arith.addi %5, %c4_i32 : i32
    %c1_i32_81 = arith.constant 1 : i32
    %119 = arith.addi %118, %c1_i32_81 : i32
    %c0_82 = arith.constant 0 : index
    %120 = arith.index_cast %119 : i32 to index
    %c0_83 = arith.constant 0 : index
    %c0_84 = arith.constant 0 : index
    %121 = vector.load %arg3[%c0_82, %120, %c0_83, %c0_84] : memref<1x9x16x9xbf16, #tpu.memory_space<vmem>>, vector<1x1x16x9xbf16>
    %122 = vector.shape_cast %121 : vector<1x1x16x9xbf16> to vector<16x9xbf16>
    %123 = vector.extract_strided_slice %117 {offsets = [0, 0], sizes = [16, 8], strides = [1, 1]} : vector<16x9xbf16> to vector<16x8xbf16>
    %124 = vector.extract_strided_slice %117 {offsets = [0, 1], sizes = [16, 8], strides = [1, 1]} : vector<16x9xbf16> to vector<16x8xbf16>
    %125 = vector.extract_strided_slice %122 {offsets = [0, 0], sizes = [16, 8], strides = [1, 1]} : vector<16x9xbf16> to vector<16x8xbf16>
    %126 = vector.extract_strided_slice %122 {offsets = [0, 1], sizes = [16, 8], strides = [1, 1]} : vector<16x9xbf16> to vector<16x8xbf16>
    %127 = tpu.concatenate %123, %124, %125, %126 in 0 : vector<16x8xbf16>, vector<16x8xbf16>, vector<16x8xbf16>, vector<16x8xbf16> -> vector<64x8xbf16>
    %cst_85 = arith.constant dense<0.000000e+00> : vector<8x8xf32>
    %128 = tpu.matmul %3, %127, %cst_85 {dimension_numbers = #tpu.dot_dimension_numbers<[1], [0], [0], [1], [0, 0, 1, 1], [], []>} : vector<8x64xbf16>, vector<64x8xbf16>, vector<8x8xf32> -> vector<8x8xf32>
    %129 = arith.addi %5, %c4_i32 : i32
    %c0_86 = arith.constant 0 : index
    %130 = arith.index_cast %129 : i32 to index
    %c0_87 = arith.constant 0 : index
    %c0_88 = arith.constant 0 : index
    %131 = vector.load %arg5[%c0_86, %130, %c0_87, %c0_88] : memref<1x8x8x8xf32, #tpu.memory_space<vmem>>, vector<1x1x8x8xf32>
    %132 = vector.shape_cast %131 : vector<1x1x8x8xf32> to vector<8x8xf32>
    %133 = vector.shape_cast %128 : vector<8x8xf32> to vector<1x1x8x8xf32>
    tpu.vector_store %arg5[%c0_86, %130, %c0_87, %c0_88], %133 {strides = array<i32>} : memref<1x8x8x8xf32, #tpu.memory_space<vmem>>, vector<1x1x8x8xf32>,
    %c0_89 = arith.constant 0 : index
    %c0_90 = arith.constant 0 : index
    %134 = vector.load %arg6[%c0_89, %c0_90] : memref<8x8xf32, #tpu.memory_space<vmem>>, vector<8x8xf32>
    %135 = arith.addf %134, %128 : vector<8x8xf32>
    %c0_91 = arith.constant 0 : index
    %c0_92 = arith.constant 0 : index
    %136 = vector.load %arg6[%c0_91, %c0_92] : memref<8x8xf32, #tpu.memory_space<vmem>>, vector<8x8xf32>
    tpu.vector_store %arg6[%c0_91, %c0_92], %135 {strides = array<i32>} : memref<8x8xf32, #tpu.memory_space<vmem>>, vector<8x8xf32>,
    %c0_93 = arith.constant 0 : index
    %c0_94 = arith.constant 0 : index
    %137 = vector.load %arg7[%c0_93, %c0_94] : memref<8x8xf32, #tpu.memory_space<vmem>>, vector<8x8xf32>
    %138 = arith.mulf %128, %128 : vector<8x8xf32>
    %139 = arith.addf %137, %138 : vector<8x8xf32>
    %c0_95 = arith.constant 0 : index
    %c0_96 = arith.constant 0 : index
    %140 = vector.load %arg7[%c0_95, %c0_96] : memref<8x8xf32, #tpu.memory_space<vmem>>, vector<8x8xf32>
    tpu.vector_store %arg7[%c0_95, %c0_96], %139 {strides = array<i32>} : memref<8x8xf32, #tpu.memory_space<vmem>>, vector<8x8xf32>,
    %c5_i32 = arith.constant 5 : i32
    %141 = arith.addi %5, %c5_i32 : i32
    %c0_97 = arith.constant 0 : index
    %142 = arith.index_cast %141 : i32 to index
    %c0_98 = arith.constant 0 : index
    %c0_99 = arith.constant 0 : index
    %143 = vector.load %arg3[%c0_97, %142, %c0_98, %c0_99] : memref<1x9x16x9xbf16, #tpu.memory_space<vmem>>, vector<1x1x16x9xbf16>
    %144 = vector.shape_cast %143 : vector<1x1x16x9xbf16> to vector<16x9xbf16>
    %145 = arith.addi %5, %c5_i32 : i32
    %c1_i32_100 = arith.constant 1 : i32
    %146 = arith.addi %145, %c1_i32_100 : i32
    %c0_101 = arith.constant 0 : index
    %147 = arith.index_cast %146 : i32 to index
    %c0_102 = arith.constant 0 : index
    %c0_103 = arith.constant 0 : index
    %148 = vector.load %arg3[%c0_101, %147, %c0_102, %c0_103] : memref<1x9x16x9xbf16, #tpu.memory_space<vmem>>, vector<1x1x16x9xbf16>
    %149 = vector.shape_cast %148 : vector<1x1x16x9xbf16> to vector<16x9xbf16>
    %150 = vector.extract_strided_slice %144 {offsets = [0, 0], sizes = [16, 8], strides = [1, 1]} : vector<16x9xbf16> to vector<16x8xbf16>
    %151 = vector.extract_strided_slice %144 {offsets = [0, 1], sizes = [16, 8], strides = [1, 1]} : vector<16x9xbf16> to vector<16x8xbf16>
    %152 = vector.extract_strided_slice %149 {offsets = [0, 0], sizes = [16, 8], strides = [1, 1]} : vector<16x9xbf16> to vector<16x8xbf16>
    %153 = vector.extract_strided_slice %149 {offsets = [0, 1], sizes = [16, 8], strides = [1, 1]} : vector<16x9xbf16> to vector<16x8xbf16>
    %154 = tpu.concatenate %150, %151, %152, %153 in 0 : vector<16x8xbf16>, vector<16x8xbf16>, vector<16x8xbf16>, vector<16x8xbf16> -> vector<64x8xbf16>
    %cst_104 = arith.constant dense<0.000000e+00> : vector<8x8xf32>
    %155 = tpu.matmul %3, %154, %cst_104 {dimension_numbers = #tpu.dot_dimension_numbers<[1], [0], [0], [1], [0, 0, 1, 1], [], []>} : vector<8x64xbf16>, vector<64x8xbf16>, vector<8x8xf32> -> vector<8x8xf32>
    %156 = arith.addi %5, %c5_i32 : i32
    %c0_105 = arith.constant 0 : index
    %157 = arith.index_cast %156 : i32 to index
    %c0_106 = arith.constant 0 : index
    %c0_107 = arith.constant 0 : index
    %158 = vector.load %arg5[%c0_105, %157, %c0_106, %c0_107] : memref<1x8x8x8xf32, #tpu.memory_space<vmem>>, vector<1x1x8x8xf32>
    %159 = vector.shape_cast %158 : vector<1x1x8x8xf32> to vector<8x8xf32>
    %160 = vector.shape_cast %155 : vector<8x8xf32> to vector<1x1x8x8xf32>
    tpu.vector_store %arg5[%c0_105, %157, %c0_106, %c0_107], %160 {strides = array<i32>} : memref<1x8x8x8xf32, #tpu.memory_space<vmem>>, vector<1x1x8x8xf32>,
    %c0_108 = arith.constant 0 : index
    %c0_109 = arith.constant 0 : index
    %161 = vector.load %arg6[%c0_108, %c0_109] : memref<8x8xf32, #tpu.memory_space<vmem>>, vector<8x8xf32>
    %162 = arith.addf %161, %155 : vector<8x8xf32>
    %c0_110 = arith.constant 0 : index
    %c0_111 = arith.constant 0 : index
    %163 = vector.load %arg6[%c0_110, %c0_111] : memref<8x8xf32, #tpu.memory_space<vmem>>, vector<8x8xf32>
    tpu.vector_store %arg6[%c0_110, %c0_111], %162 {strides = array<i32>} : memref<8x8xf32, #tpu.memory_space<vmem>>, vector<8x8xf32>,
    %c0_112 = arith.constant 0 : index
    %c0_113 = arith.constant 0 : index
    %164 = vector.load %arg7[%c0_112, %c0_113] : memref<8x8xf32, #tpu.memory_space<vmem>>, vector<8x8xf32>
    %165 = arith.mulf %155, %155 : vector<8x8xf32>
    %166 = arith.addf %164, %165 : vector<8x8xf32>
    %c0_114 = arith.constant 0 : index
    %c0_115 = arith.constant 0 : index
    %167 = vector.load %arg7[%c0_114, %c0_115] : memref<8x8xf32, #tpu.memory_space<vmem>>, vector<8x8xf32>
    tpu.vector_store %arg7[%c0_114, %c0_115], %166 {strides = array<i32>} : memref<8x8xf32, #tpu.memory_space<vmem>>, vector<8x8xf32>,
    %c6_i32 = arith.constant 6 : i32
    %168 = arith.addi %5, %c6_i32 : i32
    %c0_116 = arith.constant 0 : index
    %169 = arith.index_cast %168 : i32 to index
    %c0_117 = arith.constant 0 : index
    %c0_118 = arith.constant 0 : index
    %170 = vector.load %arg3[%c0_116, %169, %c0_117, %c0_118] : memref<1x9x16x9xbf16, #tpu.memory_space<vmem>>, vector<1x1x16x9xbf16>
    %171 = vector.shape_cast %170 : vector<1x1x16x9xbf16> to vector<16x9xbf16>
    %172 = arith.addi %5, %c6_i32 : i32
    %c1_i32_119 = arith.constant 1 : i32
    %173 = arith.addi %172, %c1_i32_119 : i32
    %c0_120 = arith.constant 0 : index
    %174 = arith.index_cast %173 : i32 to index
    %c0_121 = arith.constant 0 : index
    %c0_122 = arith.constant 0 : index
    %175 = vector.load %arg3[%c0_120, %174, %c0_121, %c0_122] : memref<1x9x16x9xbf16, #tpu.memory_space<vmem>>, vector<1x1x16x9xbf16>
    %176 = vector.shape_cast %175 : vector<1x1x16x9xbf16> to vector<16x9xbf16>
    %177 = vector.extract_strided_slice %171 {offsets = [0, 0], sizes = [16, 8], strides = [1, 1]} : vector<16x9xbf16> to vector<16x8xbf16>
    %178 = vector.extract_strided_slice %171 {offsets = [0, 1], sizes = [16, 8], strides = [1, 1]} : vector<16x9xbf16> to vector<16x8xbf16>
    %179 = vector.extract_strided_slice %176 {offsets = [0, 0], sizes = [16, 8], strides = [1, 1]} : vector<16x9xbf16> to vector<16x8xbf16>
    %180 = vector.extract_strided_slice %176 {offsets = [0, 1], sizes = [16, 8], strides = [1, 1]} : vector<16x9xbf16> to vector<16x8xbf16>
    %181 = tpu.concatenate %177, %178, %179, %180 in 0 : vector<16x8xbf16>, vector<16x8xbf16>, vector<16x8xbf16>, vector<16x8xbf16> -> vector<64x8xbf16>
    %cst_123 = arith.constant dense<0.000000e+00> : vector<8x8xf32>
    %182 = tpu.matmul %3, %181, %cst_123 {dimension_numbers = #tpu.dot_dimension_numbers<[1], [0], [0], [1], [0, 0, 1, 1], [], []>} : vector<8x64xbf16>, vector<64x8xbf16>, vector<8x8xf32> -> vector<8x8xf32>
    %183 = arith.addi %5, %c6_i32 : i32
    %c0_124 = arith.constant 0 : index
    %184 = arith.index_cast %183 : i32 to index
    %c0_125 = arith.constant 0 : index
    %c0_126 = arith.constant 0 : index
    %185 = vector.load %arg5[%c0_124, %184, %c0_125, %c0_126] : memref<1x8x8x8xf32, #tpu.memory_space<vmem>>, vector<1x1x8x8xf32>
    %186 = vector.shape_cast %185 : vector<1x1x8x8xf32> to vector<8x8xf32>
    %187 = vector.shape_cast %182 : vector<8x8xf32> to vector<1x1x8x8xf32>
    tpu.vector_store %arg5[%c0_124, %184, %c0_125, %c0_126], %187 {strides = array<i32>} : memref<1x8x8x8xf32, #tpu.memory_space<vmem>>, vector<1x1x8x8xf32>,
    %c0_127 = arith.constant 0 : index
    %c0_128 = arith.constant 0 : index
    %188 = vector.load %arg6[%c0_127, %c0_128] : memref<8x8xf32, #tpu.memory_space<vmem>>, vector<8x8xf32>
    %189 = arith.addf %188, %182 : vector<8x8xf32>
    %c0_129 = arith.constant 0 : index
    %c0_130 = arith.constant 0 : index
    %190 = vector.load %arg6[%c0_129, %c0_130] : memref<8x8xf32, #tpu.memory_space<vmem>>, vector<8x8xf32>
    tpu.vector_store %arg6[%c0_129, %c0_130], %189 {strides = array<i32>} : memref<8x8xf32, #tpu.memory_space<vmem>>, vector<8x8xf32>,
    %c0_131 = arith.constant 0 : index
    %c0_132 = arith.constant 0 : index
    %191 = vector.load %arg7[%c0_131, %c0_132] : memref<8x8xf32, #tpu.memory_space<vmem>>, vector<8x8xf32>
    %192 = arith.mulf %182, %182 : vector<8x8xf32>
    %193 = arith.addf %191, %192 : vector<8x8xf32>
    %c0_133 = arith.constant 0 : index
    %c0_134 = arith.constant 0 : index
    %194 = vector.load %arg7[%c0_133, %c0_134] : memref<8x8xf32, #tpu.memory_space<vmem>>, vector<8x8xf32>
    tpu.vector_store %arg7[%c0_133, %c0_134], %193 {strides = array<i32>} : memref<8x8xf32, #tpu.memory_space<vmem>>, vector<8x8xf32>,
    %c7_i32 = arith.constant 7 : i32
    %195 = arith.addi %5, %c7_i32 : i32
    %c0_135 = arith.constant 0 : index
    %196 = arith.index_cast %195 : i32 to index
    %c0_136 = arith.constant 0 : index
    %c0_137 = arith.constant 0 : index
    %197 = vector.load %arg3[%c0_135, %196, %c0_136, %c0_137] : memref<1x9x16x9xbf16, #tpu.memory_space<vmem>>, vector<1x1x16x9xbf16>
    %198 = vector.shape_cast %197 : vector<1x1x16x9xbf16> to vector<16x9xbf16>
    %199 = arith.addi %5, %c7_i32 : i32
    %c1_i32_138 = arith.constant 1 : i32
    %200 = arith.addi %199, %c1_i32_138 : i32
    %c0_139 = arith.constant 0 : index
    %201 = arith.index_cast %200 : i32 to index
    %c0_140 = arith.constant 0 : index
    %c0_141 = arith.constant 0 : index
    %202 = vector.load %arg3[%c0_139, %201, %c0_140, %c0_141] : memref<1x9x16x9xbf16, #tpu.memory_space<vmem>>, vector<1x1x16x9xbf16>
    %203 = vector.shape_cast %202 : vector<1x1x16x9xbf16> to vector<16x9xbf16>
    %204 = vector.extract_strided_slice %198 {offsets = [0, 0], sizes = [16, 8], strides = [1, 1]} : vector<16x9xbf16> to vector<16x8xbf16>
    %205 = vector.extract_strided_slice %198 {offsets = [0, 1], sizes = [16, 8], strides = [1, 1]} : vector<16x9xbf16> to vector<16x8xbf16>
    %206 = vector.extract_strided_slice %203 {offsets = [0, 0], sizes = [16, 8], strides = [1, 1]} : vector<16x9xbf16> to vector<16x8xbf16>
    %207 = vector.extract_strided_slice %203 {offsets = [0, 1], sizes = [16, 8], strides = [1, 1]} : vector<16x9xbf16> to vector<16x8xbf16>
    %208 = tpu.concatenate %204, %205, %206, %207 in 0 : vector<16x8xbf16>, vector<16x8xbf16>, vector<16x8xbf16>, vector<16x8xbf16> -> vector<64x8xbf16>
    %cst_142 = arith.constant dense<0.000000e+00> : vector<8x8xf32>
    %209 = tpu.matmul %3, %208, %cst_142 {dimension_numbers = #tpu.dot_dimension_numbers<[1], [0], [0], [1], [0, 0, 1, 1], [], []>} : vector<8x64xbf16>, vector<64x8xbf16>, vector<8x8xf32> -> vector<8x8xf32>
    %210 = arith.addi %5, %c7_i32 : i32
    %c0_143 = arith.constant 0 : index
    %211 = arith.index_cast %210 : i32 to index
    %c0_144 = arith.constant 0 : index
    %c0_145 = arith.constant 0 : index
    %212 = vector.load %arg5[%c0_143, %211, %c0_144, %c0_145] : memref<1x8x8x8xf32, #tpu.memory_space<vmem>>, vector<1x1x8x8xf32>
    %213 = vector.shape_cast %212 : vector<1x1x8x8xf32> to vector<8x8xf32>
    %214 = vector.shape_cast %209 : vector<8x8xf32> to vector<1x1x8x8xf32>
    tpu.vector_store %arg5[%c0_143, %211, %c0_144, %c0_145], %214 {strides = array<i32>} : memref<1x8x8x8xf32, #tpu.memory_space<vmem>>, vector<1x1x8x8xf32>,
    %c0_146 = arith.constant 0 : index
    %c0_147 = arith.constant 0 : index
    %215 = vector.load %arg6[%c0_146, %c0_147] : memref<8x8xf32, #tpu.memory_space<vmem>>, vector<8x8xf32>
    %216 = arith.addf %215, %209 : vector<8x8xf32>
    %c0_148 = arith.constant 0 : index
    %c0_149 = arith.constant 0 : index
    %217 = vector.load %arg6[%c0_148, %c0_149] : memref<8x8xf32, #tpu.memory_space<vmem>>, vector<8x8xf32>
    tpu.vector_store %arg6[%c0_148, %c0_149], %216 {strides = array<i32>} : memref<8x8xf32, #tpu.memory_space<vmem>>, vector<8x8xf32>,
    %c0_150 = arith.constant 0 : index
    %c0_151 = arith.constant 0 : index
    %218 = vector.load %arg7[%c0_150, %c0_151] : memref<8x8xf32, #tpu.memory_space<vmem>>, vector<8x8xf32>
    %219 = arith.mulf %209, %209 : vector<8x8xf32>
    %220 = arith.addf %218, %219 : vector<8x8xf32>
    %c0_152 = arith.constant 0 : index
    %c0_153 = arith.constant 0 : index
    %221 = vector.load %arg7[%c0_152, %c0_153] : memref<8x8xf32, #tpu.memory_space<vmem>>, vector<8x8xf32>
    tpu.vector_store %arg7[%c0_152, %c0_153], %220 {strides = array<i32>} : memref<8x8xf32, #tpu.memory_space<vmem>>, vector<8x8xf32>,
    %c8_i32_154 = arith.constant 8 : i32
    %c0_i32_155 = arith.constant 0 : i32
    %222 = arith.cmpi eq, %arg2, %c0_i32_155 : i32
    %223 = arith.extui %222 : i1 to i32
    %c0_i32_156 = arith.constant 0 : i32
    %224 = arith.cmpi ne, %223, %c0_i32_156 : i32
    scf.if %224 {
      %c0_157 = arith.constant 0 : index
      %c0_158 = arith.constant 0 : index
      %225 = vector.load %arg6[%c0_157, %c0_158] : memref<8x8xf32, #tpu.memory_space<vmem>>, vector<8x8xf32>
      %cst_159 = arith.constant dense<0.000000e+00> : vector<8xf32>
      %226 = vector.multi_reduction <add>, %225, %cst_159 [1] : vector<8x8xf32> to vector<8xf32>
      %227 = vector.shape_cast %226 : vector<8xf32> to vector<8x1xf32>
      %c0_160 = arith.constant 0 : index
      %c0_161 = arith.constant 0 : index
      %228 = vector.load %arg7[%c0_160, %c0_161] : memref<8x8xf32, #tpu.memory_space<vmem>>, vector<8x8xf32>
      %cst_162 = arith.constant dense<0.000000e+00> : vector<8xf32>
      %229 = vector.multi_reduction <add>, %228, %cst_162 [1] : vector<8x8xf32> to vector<8xf32>
      %230 = vector.shape_cast %229 : vector<8xf32> to vector<8x1xf32>
      %cst_163 = arith.constant 1.562500e-02 : f32
      %231 = vector.broadcast %cst_163 : f32 to vector<8x1xf32>
      %232 = arith.mulf %227, %231 : vector<8x1xf32>
      %cst_164 = arith.constant 1.562500e-02 : f32
      %233 = vector.broadcast %cst_164 : f32 to vector<8x1xf32>
      %234 = arith.mulf %230, %233 : vector<8x1xf32>
      %235 = arith.mulf %232, %232 : vector<8x1xf32>
      %236 = arith.subf %234, %235 : vector<8x1xf32>
      %cst_165 = arith.constant 0.000000e+00 : f32
      %237 = vector.broadcast %cst_165 : f32 to vector<8x1xf32>
      %238 = arith.maximumf %236, %237 : vector<8x1xf32>
      %cst_166 = arith.constant 9.99999974E-6 : f32
      %239 = vector.broadcast %cst_166 : f32 to vector<8x1xf32>
      %240 = arith.addf %238, %239 : vector<8x1xf32>
      %241 = math.rsqrt %240 : vector<8x1xf32>
      %c0_167 = arith.constant 0 : index
      %c0_168 = arith.constant 0 : index
      %c0_169 = arith.constant 0 : index
      %c0_170 = arith.constant 0 : index
      %242 = vector.load %arg5[%c0_167, %c0_168, %c0_169, %c0_170] : memref<1x8x8x8xf32, #tpu.memory_space<vmem>>, vector<1x8x8x8xf32>
      %243 = vector.shape_cast %242 : vector<1x8x8x8xf32> to vector<8x8x8xf32>
      %244 = vector.shape_cast %232 : vector<8x1xf32> to vector<1x8x1xf32>
      %245 = vector.broadcast %244 : vector<1x8x1xf32> to vector<8x8x8xf32>
      %246 = arith.subf %243, %245 : vector<8x8x8xf32>
      %247 = vector.shape_cast %241 : vector<8x1xf32> to vector<1x8x1xf32>
      %248 = vector.broadcast %247 : vector<1x8x1xf32> to vector<8x8x8xf32>
      %249 = arith.mulf %246, %248 : vector<8x8x8xf32>
      %cst_171 = arith.constant 0.000000e+00 : f32
      %250 = vector.broadcast %cst_171 : f32 to vector<8x8x8xf32>
      %251 = arith.maximumf %249, %250 : vector<8x8x8xf32>
      %c0_172 = arith.constant 0 : index
      %c0_173 = arith.constant 0 : index
      %c0_174 = arith.constant 0 : index
      %c0_175 = arith.constant 0 : index
      %252 = vector.load %arg5[%c0_172, %c0_173, %c0_174, %c0_175] : memref<1x8x8x8xf32, #tpu.memory_space<vmem>>, vector<1x8x8x8xf32>
      %253 = vector.shape_cast %252 : vector<1x8x8x8xf32> to vector<8x8x8xf32>
      %254 = vector.shape_cast %251 : vector<8x8x8xf32> to vector<1x8x8x8xf32>
      tpu.vector_store %arg5[%c0_172, %c0_173, %c0_174, %c0_175], %254 {strides = array<i32>} : memref<1x8x8x8xf32, #tpu.memory_space<vmem>>, vector<1x8x8x8xf32>,
    } else {
    }
    return
  }
  func.func @transform_0(%arg0: i32, %arg1: i32, %arg2: i32) -> (i32, i32, i32, i32) {
    %c0_i32 = arith.constant 0 : i32
    %c0_i32_0 = arith.constant 0 : i32
    %c0_i32_1 = arith.constant 0 : i32
    %c0_i32_2 = arith.constant 0 : i32
    return %arg0, %c0_i32, %c0_i32_0, %c0_i32_1 : i32, i32, i32, i32
  }
  func.func @transform_1(%arg0: i32, %arg1: i32, %arg2: i32) -> (i32, i32) {
    %c0_i32 = arith.constant 0 : i32
    %c0_i32_0 = arith.constant 0 : i32
    return %arg1, %c0_i32 : i32, i32
  }
  func.func @transform_2(%arg0: i32, %arg1: i32, %arg2: i32) -> (i32, i32, i32, i32) {
    %c0_i32 = arith.constant 0 : i32
    %c0_i32_0 = arith.constant 0 : i32
    %c0_i32_1 = arith.constant 0 : i32
    return %arg0, %c0_i32, %arg1, %c0_i32_0 : i32, i32, i32, i32
  }
}

</mosaic_0001>

<llo_original>
// kernel: tpu_custom_call.1
$region0: #{tpu_custom_call.1}
  #allocation0 [shape = 'u32[]', space=smem, size = 0x4, offset = 0x4, fixed_abs, tag = 'smem constant byte address 0x4 - core index']
  #allocation1 [shape = 'u32[144,128]{1,0:T(1,128)}', space=vmem, size = 0x12000, scoped, tag = 'internal scratch']
  #allocation2 [shape = 'f32[8,8]{1,0:T(8,128)}', space=vmem, size = 0x1000, scoped, tag = 'scratch operand']
  #allocation3 [shape = 'f32[8,8]{1,0:T(8,128)}', space=vmem, size = 0x1000, scoped, tag = 'scratch operand']
  %s0 = inlined_call_operand.vmem [shape: bf16[2,9,16,9], index: 0, kind: input, shape index: {}]
  %s1 = inlined_call_operand.vmem [shape: bf16[8,64], index: 1, kind: input, shape index: {}]
  %s2 = inlined_call_operand.hbm [shape: f32[2,8,8,8], index: 2, kind: output, shape index: {}]
  %s3 = sld [smem:[#allocation0]]
  $region49: #{tpu_custom_call.1} parent=0
    _
  %s5 = ssub.s32 1, %s3
  %s6 = scalar_select 0, %s5, %s3
  $region1: #{tpu_custom_call.1} parent=0
    #allocation4 [shape = 'u8[65536]{0}', space=vmem, size = 0x10000, scoped, tag = 'output window, operand 0']
    #allocation5 [shape = 's32[2]{0}', space=sflag, size = 0x8, scoped, tag = 'scoped memory for tpu_custom_call.1']
    %7 = vsyncpa [#allocation5], 0
    %s8 = scalar_lea.sflag [#allocation5], 1
    %9 = vsyncpa %s8, 0
    loop: start=0, step=1, limit=4
    $region2: #{tpu_custom_call.1} parent=1 // loop_pre_header
      _
    $region3: #{tpu_custom_call.1} parent=1 // loop_header
      %s11 = sphi 0, %s15
      %p12 = scmp.ge.s32.totalorder %s11, 4
      %s18 = sphi 0, %s37
      %s19 = sphi 0, %s33
      %s20 = sphi 0, %s29
      %s21 = sphi 0, %s18
      %s22 = sphi 0, %s19
      %s23 = sphi 0, %s20
      %s24 = sphi 0, %s21
      %s25 = sphi 0, %s22
      %s26 = sphi 0, %s23
      %s40 = sphi 0, %s42
      %s43 = sphi 0, %s40
      %s44 = sphi 0, %s43
      %s60 = sphi 0, %s44
      %s66 = sphi 0, %s68
      %s69 = sphi 0, %s66
      %s70 = sphi 0, %s69
      %s86 = sphi 0, %s70
      %s94 = sphi 0, %s96
      %s97 = sphi 0, %s94
      %s98 = sphi 0, %s97
      %s114 = sphi 0, %s98
    $region4: #{tpu_custom_call.1} parent=1 // loop_header_branch
      %14 = sbr.rel (%p12) target = $region8
    $region5: #{tpu_custom_call.1} parent=1 // loop_body
      %s16 = ssub.s32 %s11, 1
      %s17 = ssub.s32 %s11, 2
      %s27 = sadd.s32 1, %s20
      %p28 = scmp.ge.s32.totalorder %s27, 1
      %s29 = scalar_select %p28, 0, %s27
      %s30 = sadd.s32 1, %s19
      %s31 = scalar_select %p28, %s30, %s19
      %p32 = scmp.ge.s32.totalorder %s31, 1
      %s33 = scalar_select %p32, 0, %s31
      %s34 = sadd.s32 1, %s18
      %s35 = scalar_select %p32, %s34, %s18
      %p36 = scmp.ge.s32.totalorder %s35, 2
      %s37 = scalar_select %p36, 0, %s35
      %s38 = ssub.s32 %s18, %s37
      %p39 = scmp.eq.s32.totalorder %s38, 0
      %s41 = sadd.s32 %s40, 1
      %s42 = scalar_select %p39, %s40, %s41
      %p45 = pneg %p39
      %p46 = scmp.eq.s32.totalorder %s11, 1
      %p47 = por %p45, %p46
      %p48 = scmp.ne.s32.totalorder %s40, %s43
      %p49 = scmp.eq.s32.totalorder %s11, 0
      %p50 = por %p48, %p49
      %p51 = scmp.ne.s32.totalorder %s40, %s43
      %p52 = scmp.eq.s32.totalorder %s16, 1
      %p53 = por %p51, %p52
      %p54 = scmp.ne.s32.totalorder %s43, %s44
      %p55 = scmp.eq.s32.totalorder %s16, 0
      %p56 = por %p54, %p55
      %p57 = scmp.ne.s32.totalorder %s43, %s44
      %p58 = scmp.eq.s32.totalorder %s17, 1
      %p59 = por %p57, %p58
      %p61 = scmp.ne.s32.totalorder %s44, %s60
      %p62 = scmp.eq.s32.totalorder %s17, 0
      %p63 = por %p61, %p62
      %s64 = ssub.s32 %s19, %s33
      %p65 = scmp.eq.s32.totalorder %s64, 0
      %s67 = sadd.s32 %s66, 1
      %s68 = scalar_select %p65, %s66, %s67
      %p71 = pneg %p65
      %p72 = scmp.eq.s32.totalorder %s11, 1
      %p73 = por %p71, %p72
      %p74 = scmp.ne.s32.totalorder %s66, %s69
      %p75 = scmp.eq.s32.totalorder %s11, 0
      %p76 = por %p74, %p75
      %p77 = scmp.ne.s32.totalorder %s66, %s69
      %p78 = scmp.eq.s32.totalorder %s16, 1
      %p79 = por %p77, %p78
      %p80 = scmp.ne.s32.totalorder %s69, %s70
      %p81 = scmp.eq.s32.totalorder %s16, 0
      %p82 = por %p80, %p81
      %p83 = scmp.ne.s32.totalorder %s69, %s70
      %p84 = scmp.eq.s32.totalorder %s17, 1
      %p85 = por %p83, %p84
      %p87 = scmp.ne.s32.totalorder %s70, %s86
      %p88 = scmp.eq.s32.totalorder %s17, 0
      %p89 = por %p87, %p88
      %s90 = ssub.s32 %s18, %s37
      %s91 = ssub.s32 %s19, %s33
      %s92 = sor.u32 %s90, %s91
      %p93 = scmp.eq.s32.totalorder %s92, 0
      %s95 = sadd.s32 %s94, 1
      %s96 = scalar_select %p93, %s94, %s95
      %p99 = pneg %p93
      %p100 = scmp.eq.s32.totalorder %s11, 1
      %p101 = por %p99, %p100
      %p102 = scmp.ne.s32.totalorder %s94, %s97
      %p103 = scmp.eq.s32.totalorder %s11, 0
      %p104 = por %p102, %p103
      %p105 = scmp.ne.s32.totalorder %s94, %s97
      %p106 = scmp.eq.s32.totalorder %s16, 1
      %p107 = por %p105, %p106
      %p108 = scmp.ne.s32.totalorder %s97, %s98
      %p109 = scmp.eq.s32.totalorder %s16, 0
      %p110 = por %p108, %p109
      %p111 = scmp.ne.s32.totalorder %s97, %s98
      %p112 = scmp.eq.s32.totalorder %s17, 1
      %p113 = por %p111, %p112
      %p115 = scmp.ne.s32.totalorder %s98, %s114
      %p116 = scmp.eq.s32.totalorder %s17, 0
      %p117 = por %p115, %p116
      %p118 = scmp.le.s32.totalorder 1, %s11
      %p119 = scmp.lt.s32.totalorder %s11, 3
      %p120 = pnand %p118, %p119
      %p121 = pneg %p120
      // Predicated region
      $region9: #{tpu_custom_call.1} parent=5 // pred_check
        _
      $region10: #{tpu_custom_call.1} parent=5 // pred_check_branch
        %123 = sbr.rel (%p120) target = $region12
      $region11: #{tpu_custom_call.1} parent=5 // pred_region
        %s124 = ssub.s32 %s11, 1
        // Predicated region
        $region13: #{tpu_custom_call.1} parent=11 // pred_check
          %p125 = pneg %p82
        $region14: #{tpu_custom_call.1} parent=11 // pred_check_branch
          %127 = sbr.rel (%p125) target = $region16
        $region15: #{tpu_custom_call.1} parent=11 // pred_region
          %p128 = scmp.lt.s32.totalorder %s22, 0
          %s129 = scalar_select %p128, %s22, 0
          %s130 = smul.addr %s129, 4
          %s131 = scalar_lea.vmem %s1, %s130
        $region16: #{tpu_custom_call.1} parent=11 // pred_fallthru
          _
      $region12: #{tpu_custom_call.1} parent=5 // pred_fallthru
        _
      %p132 = scmp.lt.s32.totalorder %s11, 2
      // Predicated region
      $region17: #{tpu_custom_call.1} parent=5 // pred_check
        %p133 = pneg %p132
      $region18: #{tpu_custom_call.1} parent=5 // pred_check_branch
        %135 = sbr.rel (%p133) target = $region20
      $region19: #{tpu_custom_call.1} parent=5 // pred_region
        // Predicated region
        $region21: #{tpu_custom_call.1} parent=19 // pred_check
          %p136 = pneg %p50
        $region22: #{tpu_custom_call.1} parent=19 // pred_check_branch
          %138 = sbr.rel (%p136) target = $region24
        $region23: #{tpu_custom_call.1} parent=19 // pred_region
          %p139 = scmp.lt.s32.totalorder %s18, 1
          %s140 = scalar_select %p139, %s18, 1
          %s141 = smul.addr %s140, 18
          %s142 = smul.addr %s141, 4
          %s143 = scalar_lea.vmem %s0, %s142
        $region24: #{tpu_custom_call.1} parent=19 // pred_fallthru
          _
      $region20: #{tpu_custom_call.1} parent=5 // pred_fallthru
        _
      %p144 = scmp.le.s32.totalorder 1, %s11
      %p145 = scmp.lt.s32.totalorder %s11, 3
      %p146 = pnand %p144, %p145
      %p147 = pneg %p146
      // Predicated region
      $region25: #{tpu_custom_call.1} parent=5 // pred_check
        _
      $region26: #{tpu_custom_call.1} parent=5 // pred_check_branch
        %149 = sbr.rel (%p146) target = $region28
      $region27: #{tpu_custom_call.1} parent=5 // pred_region
        %s150 = ssub.s32 %s11, 1
        %p151 = scmp.lt.s32.totalorder %s21, 1
        %s152 = scalar_select %p151, %s21, 1
        %s153 = smul.addr %s152, 18
        %s154 = smul.addr %s153, 4
        %s155 = scalar_lea.vmem %s0, %s154
        %p156 = pneg %p56
        %p157 = pneg %p53
        %p158 = scmp.lt.s32.totalorder %s22, 0
        %s159 = scalar_select %p158, %s22, 0
        %s160 = smul.addr %s159, 4
        %s161 = scalar_lea.vmem %s1, %s160
        %p162 = pneg %p82
        %p163 = pneg %p79
        %p164 = pneg %p110
        %p165 = pneg %p107
        %s166 = sand.u32 %s97, 1
        %s167 = scalar_lea.sflag [#allocation5], %s166
        %s168 = sand.u32 %s97, 1
        %s169 = smul.addr %s168, 64
        %s170 = scalar_lea.vmem [#allocation4], %s169
        %p171 = scmp.lt.s32.totalorder %s21, 1
        %s172 = scalar_select %p171, %s21, 1
        %s173 = smul.addr %s172, 18
        %s174 = smul.addr %s173, 4
        %s175 = scalar_lea.vmem %s0, %s174
        %p176 = scmp.lt.s32.totalorder %s22, 0
        %s177 = scalar_select %p176, %s22, 0
        %s178 = smul.addr %s177, 4
        %s179 = scalar_lea.vmem %s1, %s178
        %p181 = scmp.eq.s32.totalorder %s23, 0
        // Predicated region
        $region29: #{tpu_custom_call.1} parent=27 // pred_check
          %p182 = pneg %p181
        $region30: #{tpu_custom_call.1} parent=27 // pred_check_branch
          %184 = sbr.rel (%p182) target = $region32
        $region31: #{tpu_custom_call.1} parent=27 // pred_region
          %vm185 = vcmask 64512
          %186 = vst.msk [vmem:[#allocation2] sm:$0xff] %vm185, 0.0
          %187 = vst.msk [vmem:[#allocation3] sm:$0xff] %vm185, 0.0
        $region32: #{tpu_custom_call.1} parent=27 // pred_fallthru
          _
        %v188 = vld [vmem:[%s179] sm:$0xf]
        %s189 = smul.u32 %s23, 8
        %s190 = smul.u32 %s189, 2
        %s191 = smul.addr %s190, 4
        %s192 = scalar_lea.vmem %s175, %s191
        %v193 = vld [vmem:[%s192] sm:$0xf]
        %v194 = vld [vmem:[%s192 + $0x4] sm:$0xf]
        %s195 = sadd.s32 %s189, 1
        %s196 = smul.u32 %s195, 2
        %s197 = smul.addr %s196, 4
        %s198 = scalar_lea.vmem %s175, %s197
        %v199 = vld [vmem:[%s198] sm:$0xf]
        %v200 = vld [vmem:[%s198 + $0x4] sm:$0xf]
        %v203 = vunpack.c.l.b16 %v193
        %v204 = vunpack.c.l.b16 %v194
        %v205 = vpack.c.b16 %v204, %v203
        %207 = vrot.lane.b32.xlu0 %v205, 127
        %v208 = vpop.permute.xlu0 %207
        %v212 = vunpack.c.l.b16 %v199
        %v213 = vunpack.c.l.b16 %v200
        %v214 = vpack.c.b16 %v213, %v212
        %216 = vrot.lane.b32.xlu0 %v214, 127
        %v217 = vpop.permute.xlu0 %216
        %vm219 = vcmask 523264
        %v221 = vsel %vm219, %v188, 0
        %223 = vmatprep.subr.bf16.mxu0 0
        %224 = vmatpush1.bf16.msra.mxu0 0
        %225 = vmatprep.subr.bf16.mxu0 0
        %226 = vmatpush1.bf16.msra.mxu0 0
        %227 = vmatprep.subr.bf16.mxu0 0
        %228 = vmatpush1.bf16.msra.mxu0 0
        %229 = vmatprep.subr.bf16.mxu0 0
        %230 = vmatpush1.bf16.msra.mxu0 0
        %231 = vmatprep.subr.bf16.mxu0 0
        %232 = vmatpush1.bf16.msra.mxu0 %v217
        %233 = vmatprep.subr.bf16.mxu0 0
        %234 = vmatpush1.bf16.msra.mxu0 %v214
        %235 = vmatprep.subr.bf16.mxu0 0
        %236 = vmatpush1.bf16.msra.mxu0 %v208
        %237 = vmatprep.subr.bf16.mxu0 0
        %238 = vmatpush1.bf16.msra.mxu0 %v205
        %239 = vmatprep.subr.bf16.mxu0 0
        %240 = vmatpush2.bf16.msra.mxu0 0
        %241 = vmatprep.subr.bf16.mxu0 0
        %242 = vmatpush2.bf16.msra.mxu0 0
        %243 = vmatprep.subr.bf16.mxu0 0
        %244 = vmatpush2.bf16.msra.mxu0 0
        %245 = vmatprep.subr.bf16.mxu0 0
        %246 = vmatpush2.bf16.msra.mxu0 0
        %247 = vmatprep.subr.bf16.mxu0 0
        %248 = vmatpush2.bf16.msra.mxu0 0
        %249 = vmatprep.subr.bf16.mxu0 0
        %250 = vmatpush2.bf16.msra.mxu0 0
        %251 = vmatprep.subr.bf16.mxu0 0
        %252 = vmatpush2.bf16.msra.mxu0 0
        %253 = vmatprep.subr.bf16.mxu0 0
        %254 = vmatpush2.bf16.msra.mxu0 0
        %255 = vmatprep.mubr.bf16.mxu0 0
        %256 = vmatmul.mubr.bf16.gmra.mxu0 %v221
        %v257 = vpop.f32.mrf.mxu0
        %v258 = vadd.f32 0.0, %v257
        %v259 = vpop.f32.mrf.mxu0
        %v260 = vpop.f32.mrf.mxu0
        %v261 = vpop.f32.mrf.mxu0
        %262 = vdwg.mxu0
        %s263 = smul.u32 %s189, 8
        %s264 = scalar_lea.vmem %s170, %s263 [#allocation4]
        %vm265 = vcmask 64512
        %266 = vst.msk [vmem:[%s264] sm:$0xff] %vm265, %v258
        %v267 = vld [vmem:[#allocation2] sm:$0xff]
        %v268 = vadd.f32 %v267, %v258
        %269 = vst.msk [vmem:[#allocation2] sm:$0xff] %vm265, %v268
        %v270 = vld [vmem:[#allocation3] sm:$0xff]
        %v271 = vmul.f32 %v258, %v258
        %v272 = vadd.f32 %v270, %v271
        %273 = vst.msk [vmem:[#allocation3] sm:$0xff] %vm265, %v272
        %v274 = vld [vmem:[%s198] sm:$0xf]
        %v275 = vld [vmem:[%s198 + $0x4] sm:$0xf]
        %s276 = sadd.s32 %s189, 2
        %s277 = smul.u32 %s276, 2
        %s278 = smul.addr %s277, 4
        %s279 = scalar_lea.vmem %s175, %s278
        %v280 = vld [vmem:[%s279] sm:$0xf]
        %v281 = vld [vmem:[%s279 + $0x4] sm:$0xf]
        %v284 = vunpack.c.l.b16 %v274
        %v285 = vunpack.c.l.b16 %v275
        %v286 = vpack.c.b16 %v285, %v284
        %288 = vrot.lane.b32.xlu0 %v286, 127
        %v289 = vpop.permute.xlu0 %288
        %v293 = vunpack.c.l.b16 %v280
        %v294 = vunpack.c.l.b16 %v281
        %v295 = vpack.c.b16 %v294, %v293
        %297 = vrot.lane.b32.xlu0 %v295, 127
        %v298 = vpop.permute.xlu0 %297
        %300 = vmatprep.subr.bf16.mxu0 0
        %301 = vmatpush1.bf16.msra.mxu0 0
        %302 = vmatprep.subr.bf16.mxu0 0
        %303 = vmatpush1.bf16.msra.mxu0 0
        %304 = vmatprep.subr.bf16.mxu0 0
        %305 = vmatpush1.bf16.msra.mxu0 0
        %306 = vmatprep.subr.bf16.mxu0 0
        %307 = vmatpush1.bf16.msra.mxu0 0
        %308 = vmatprep.subr.bf16.mxu0 0
        %309 = vmatpush1.bf16.msra.mxu0 %v298
        %310 = vmatprep.subr.bf16.mxu0 0
        %311 = vmatpush1.bf16.msra.mxu0 %v295
        %312 = vmatprep.subr.bf16.mxu0 0
        %313 = vmatpush1.bf16.msra.mxu0 %v289
        %314 = vmatprep.subr.bf16.mxu0 0
        %315 = vmatpush1.bf16.msra.mxu0 %v286
        %316 = vmatprep.subr.bf16.mxu0 0
        %317 = vmatpush2.bf16.msra.mxu0 0
        %318 = vmatprep.subr.bf16.mxu0 0
        %319 = vmatpush2.bf16.msra.mxu0 0
        %320 = vmatprep.subr.bf16.mxu0 0
        %321 = vmatpush2.bf16.msra.mxu0 0
        %322 = vmatprep.subr.bf16.mxu0 0
        %323 = vmatpush2.bf16.msra.mxu0 0
        %324 = vmatprep.subr.bf16.mxu0 0
        %325 = vmatpush2.bf16.msra.mxu0 0
        %326 = vmatprep.subr.bf16.mxu0 0
        %327 = vmatpush2.bf16.msra.mxu0 0
        %328 = vmatprep.subr.bf16.mxu0 0
        %329 = vmatpush2.bf16.msra.mxu0 0
        %330 = vmatprep.subr.bf16.mxu0 0
        %331 = vmatpush2.bf16.msra.mxu0 0
        %332 = vmatprep.mubr.bf16.mxu0 0
        %333 = vmatmul.mubr.bf16.gmra.mxu0 %v221
        %v334 = vpop.f32.mrf.mxu0
        %v335 = vadd.f32 0.0, %v334
        %v336 = vpop.f32.mrf.mxu0
        %v337 = vpop.f32.mrf.mxu0
        %v338 = vpop.f32.mrf.mxu0
        %339 = vdwg.mxu0
        %s340 = smul.u32 %s195, 8
        %s341 = scalar_lea.vmem %s170, %s340 [#allocation4]
        %342 = vst.msk [vmem:[%s341] sm:$0xff] %vm265, %v335
        %v343 = vld [vmem:[#allocation2] sm:$0xff]
        %v344 = vadd.f32 %v343, %v335
        %345 = vst.msk [vmem:[#allocation2] sm:$0xff] %vm265, %v344
        %v346 = vld [vmem:[#allocation3] sm:$0xff]
        %v347 = vmul.f32 %v335, %v335
        %v348 = vadd.f32 %v346, %v347
        %349 = vst.msk [vmem:[#allocation3] sm:$0xff] %vm265, %v348
        %v350 = vld [vmem:[%s279] sm:$0xf]
        %v351 = vld [vmem:[%s279 + $0x4] sm:$0xf]
        %s352 = sadd.s32 %s189, 3
        %s353 = smul.u32 %s352, 2
        %s354 = smul.addr %s353, 4
        %s355 = scalar_lea.vmem %s175, %s354
        %v356 = vld [vmem:[%s355] sm:$0xf]
        %v357 = vld [vmem:[%s355 + $0x4] sm:$0xf]
        %v360 = vunpack.c.l.b16 %v350
        %v361 = vunpack.c.l.b16 %v351
        %v362 = vpack.c.b16 %v361, %v360
        %364 = vrot.lane.b32.xlu0 %v362, 127
        %v365 = vpop.permute.xlu0 %364
        %v369 = vunpack.c.l.b16 %v356
        %v370 = vunpack.c.l.b16 %v357
        %v371 = vpack.c.b16 %v370, %v369
        %373 = vrot.lane.b32.xlu0 %v371, 127
        %v374 = vpop.permute.xlu0 %373
        %376 = vmatprep.subr.bf16.mxu0 0
        %377 = vmatpush1.bf16.msra.mxu0 0
        %378 = vmatprep.subr.bf16.mxu0 0
        %379 = vmatpush1.bf16.msra.mxu0 0
        %380 = vmatprep.subr.bf16.mxu0 0
        %381 = vmatpush1.bf16.msra.mxu0 0
        %382 = vmatprep.subr.bf16.mxu0 0
        %383 = vmatpush1.bf16.msra.mxu0 0
        %384 = vmatprep.subr.bf16.mxu0 0
        %385 = vmatpush1.bf16.msra.mxu0 %v374
        %386 = vmatprep.subr.bf16.mxu0 0
        %387 = vmatpush1.bf16.msra.mxu0 %v371
        %388 = vmatprep.subr.bf16.mxu0 0
        %389 = vmatpush1.bf16.msra.mxu0 %v365
        %390 = vmatprep.subr.bf16.mxu0 0
        %391 = vmatpush1.bf16.msra.mxu0 %v362
        %392 = vmatprep.subr.bf16.mxu0 0
        %393 = vmatpush2.bf16.msra.mxu0 0
        %394 = vmatprep.subr.bf16.mxu0 0
        %395 = vmatpush2.bf16.msra.mxu0 0
        %396 = vmatprep.subr.bf16.mxu0 0
        %397 = vmatpush2.bf16.msra.mxu0 0
        %398 = vmatprep.subr.bf16.mxu0 0
        %399 = vmatpush2.bf16.msra.mxu0 0
        %400 = vmatprep.subr.bf16.mxu0 0
        %401 = vmatpush2.bf16.msra.mxu0 0
        %402 = vmatprep.subr.bf16.mxu0 0
        %403 = vmatpush2.bf16.msra.mxu0 0
        %404 = vmatprep.subr.bf16.mxu0 0
        %405 = vmatpush2.bf16.msra.mxu0 0
        %406 = vmatprep.subr.bf16.mxu0 0
        %407 = vmatpush2.bf16.msra.mxu0 0
        %408 = vmatprep.mubr.bf16.mxu0 0
        %409 = vmatmul.mubr.bf16.gmra.mxu0 %v221
        %v410 = vpop.f32.mrf.mxu0
        %v411 = vadd.f32 0.0, %v410
        %v412 = vpop.f32.mrf.mxu0
        %v413 = vpop.f32.mrf.mxu0
        %v414 = vpop.f32.mrf.mxu0
        %415 = vdwg.mxu0
        %s416 = smul.u32 %s276, 8
        %s417 = scalar_lea.vmem %s170, %s416 [#allocation4]
        %418 = vst.msk [vmem:[%s417] sm:$0xff] %vm265, %v411
        %v419 = vld [vmem:[#allocation2] sm:$0xff]
        %v420 = vadd.f32 %v419, %v411
        %421 = vst.msk [vmem:[#allocation2] sm:$0xff] %vm265, %v420
        %v422 = vld [vmem:[#allocation3] sm:$0xff]
        %v423 = vmul.f32 %v411, %v411
        %v424 = vadd.f32 %v422, %v423
        %425 = vst.msk [vmem:[#allocation3] sm:$0xff] %vm265, %v424
        %v426 = vld [vmem:[%s355] sm:$0xf]
        %v427 = vld [vmem:[%s355 + $0x4] sm:$0xf]
        %s428 = sadd.s32 %s189, 4
        %s429 = smul.u32 %s428, 2
        %s430 = smul.addr %s429, 4
        %s431 = scalar_lea.vmem %s175, %s430
        %v432 = vld [vmem:[%s431] sm:$0xf]
        %v433 = vld [vmem:[%s431 + $0x4] sm:$0xf]
        %v436 = vunpack.c.l.b16 %v426
        %v437 = vunpack.c.l.b16 %v427
        %v438 = vpack.c.b16 %v437, %v436
        %440 = vrot.lane.b32.xlu0 %v438, 127
        %v441 = vpop.permute.xlu0 %440
        %v445 = vunpack.c.l.b16 %v432
        %v446 = vunpack.c.l.b16 %v433
        %v447 = vpack.c.b16 %v446, %v445
        %449 = vrot.lane.b32.xlu0 %v447, 127
        %v450 = vpop.permute.xlu0 %449
        %452 = vmatprep.subr.bf16.mxu0 0
        %453 = vmatpush1.bf16.msra.mxu0 0
        %454 = vmatprep.subr.bf16.mxu0 0
        %455 = vmatpush1.bf16.msra.mxu0 0
        %456 = vmatprep.subr.bf16.mxu0 0
        %457 = vmatpush1.bf16.msra.mxu0 0
        %458 = vmatprep.subr.bf16.mxu0 0
        %459 = vmatpush1.bf16.msra.mxu0 0
        %460 = vmatprep.subr.bf16.mxu0 0
        %461 = vmatpush1.bf16.msra.mxu0 %v450
        %462 = vmatprep.subr.bf16.mxu0 0
        %463 = vmatpush1.bf16.msra.mxu0 %v447
        %464 = vmatprep.subr.bf16.mxu0 0
        %465 = vmatpush1.bf16.msra.mxu0 %v441
        %466 = vmatprep.subr.bf16.mxu0 0
        %467 = vmatpush1.bf16.msra.mxu0 %v438
        %468 = vmatprep.subr.bf16.mxu0 0
        %469 = vmatpush2.bf16.msra.mxu0 0
        %470 = vmatprep.subr.bf16.mxu0 0
        %471 = vmatpush2.bf16.msra.mxu0 0
        %472 = vmatprep.subr.bf16.mxu0 0
        %473 = vmatpush2.bf16.msra.mxu0 0
        %474 = vmatprep.subr.bf16.mxu0 0
        %475 = vmatpush2.bf16.msra.mxu0 0
        %476 = vmatprep.subr.bf16.mxu0 0
        %477 = vmatpush2.bf16.msra.mxu0 0
        %478 = vmatprep.subr.bf16.mxu0 0
        %479 = vmatpush2.bf16.msra.mxu0 0
        %480 = vmatprep.subr.bf16.mxu0 0
        %481 = vmatpush2.bf16.msra.mxu0 0
        %482 = vmatprep.subr.bf16.mxu0 0
        %483 = vmatpush2.bf16.msra.mxu0 0
        %484 = vmatprep.mubr.bf16.mxu0 0
        %485 = vmatmul.mubr.bf16.gmra.mxu0 %v221
        %v486 = vpop.f32.mrf.mxu0
        %v487 = vadd.f32 0.0, %v486
        %v488 = vpop.f32.mrf.mxu0
        %v489 = vpop.f32.mrf.mxu0
        %v490 = vpop.f32.mrf.mxu0
        %491 = vdwg.mxu0
        %s492 = smul.u32 %s352, 8
        %s493 = scalar_lea.vmem %s170, %s492 [#allocation4]
        %494 = vst.msk [vmem:[%s493] sm:$0xff] %vm265, %v487
        %v495 = vld [vmem:[#allocation2] sm:$0xff]
        %v496 = vadd.f32 %v495, %v487
        %497 = vst.msk [vmem:[#allocation2] sm:$0xff] %vm265, %v496
        %v498 = vld [vmem:[#allocation3] sm:$0xff]
        %v499 = vmul.f32 %v487, %v487
        %v500 = vadd.f32 %v498, %v499
        %501 = vst.msk [vmem:[#allocation3] sm:$0xff] %vm265, %v500
        %v502 = vld [vmem:[%s431] sm:$0xf]
        %v503 = vld [vmem:[%s431 + $0x4] sm:$0xf]
        %s504 = sadd.s32 %s189, 5
        %s505 = smul.u32 %s504, 2
        %s506 = smul.addr %s505, 4
        %s507 = scalar_lea.vmem %s175, %s506
        %v508 = vld [vmem:[%s507] sm:$0xf]
        %v509 = vld [vmem:[%s507 + $0x4] sm:$0xf]
        %v512 = vunpack.c.l.b16 %v502
        %v513 = vunpack.c.l.b16 %v503
        %v514 = vpack.c.b16 %v513, %v512
        %516 = vrot.lane.b32.xlu0 %v514, 127
        %v517 = vpop.permute.xlu0 %516
        %v521 = vunpack.c.l.b16 %v508
        %v522 = vunpack.c.l.b16 %v509
        %v523 = vpack.c.b16 %v522, %v521
        %525 = vrot.lane.b32.xlu0 %v523, 127
        %v526 = vpop.permute.xlu0 %525
        %528 = vmatprep.subr.bf16.mxu0 0
        %529 = vmatpush1.bf16.msra.mxu0 0
        %530 = vmatprep.subr.bf16.mxu0 0
        %531 = vmatpush1.bf16.msra.mxu0 0
        %532 = vmatprep.subr.bf16.mxu0 0
        %533 = vmatpush1.bf16.msra.mxu0 0
        %534 = vmatprep.subr.bf16.mxu0 0
        %535 = vmatpush1.bf16.msra.mxu0 0
        %536 = vmatprep.subr.bf16.mxu0 0
        %537 = vmatpush1.bf16.msra.mxu0 %v526
        %538 = vmatprep.subr.bf16.mxu0 0
        %539 = vmatpush1.bf16.msra.mxu0 %v523
        %540 = vmatprep.subr.bf16.mxu0 0
        %541 = vmatpush1.bf16.msra.mxu0 %v517
        %542 = vmatprep.subr.bf16.mxu0 0
        %543 = vmatpush1.bf16.msra.mxu0 %v514
        %544 = vmatprep.subr.bf16.mxu0 0
        %545 = vmatpush2.bf16.msra.mxu0 0
        %546 = vmatprep.subr.bf16.mxu0 0
        %547 = vmatpush2.bf16.msra.mxu0 0
        %548 = vmatprep.subr.bf16.mxu0 0
        %549 = vmatpush2.bf16.msra.mxu0 0
        %550 = vmatprep.subr.bf16.mxu0 0
        %551 = vmatpush2.bf16.msra.mxu0 0
        %552 = vmatprep.subr.bf16.mxu0 0
        %553 = vmatpush2.bf16.msra.mxu0 0
        %554 = vmatprep.subr.bf16.mxu0 0
        %555 = vmatpush2.bf16.msra.mxu0 0
        %556 = vmatprep.subr.bf16.mxu0 0
        %557 = vmatpush2.bf16.msra.mxu0 0
        %558 = vmatprep.subr.bf16.mxu0 0
        %559 = vmatpush2.bf16.msra.mxu0 0
        %560 = vmatprep.mubr.bf16.mxu0 0
        %561 = vmatmul.mubr.bf16.gmra.mxu0 %v221
        %v562 = vpop.f32.mrf.mxu0
        %v563 = vadd.f32 0.0, %v562
        %v564 = vpop.f32.mrf.mxu0
        %v565 = vpop.f32.mrf.mxu0
        %v566 = vpop.f32.mrf.mxu0
        %567 = vdwg.mxu0
        %s568 = smul.u32 %s428, 8
        %s569 = scalar_lea.vmem %s170, %s568 [#allocation4]
        %570 = vst.msk [vmem:[%s569] sm:$0xff] %vm265, %v563
        %v571 = vld [vmem:[#allocation2] sm:$0xff]
        %v572 = vadd.f32 %v571, %v563
        %573 = vst.msk [vmem:[#allocation2] sm:$0xff] %vm265, %v572
        %v574 = vld [vmem:[#allocation3] sm:$0xff]
        %v575 = vmul.f32 %v563, %v563
        %v576 = vadd.f32 %v574, %v575
        %577 = vst.msk [vmem:[#allocation3] sm:$0xff] %vm265, %v576
        %v578 = vld [vmem:[%s507] sm:$0xf]
        %v579 = vld [vmem:[%s507 + $0x4] sm:$0xf]
        %s580 = sadd.s32 %s189, 6
        %s581 = smul.u32 %s580, 2
        %s582 = smul.addr %s581, 4
        %s583 = scalar_lea.vmem %s175, %s582
        %v584 = vld [vmem:[%s583] sm:$0xf]
        %v585 = vld [vmem:[%s583 + $0x4] sm:$0xf]
        %v588 = vunpack.c.l.b16 %v578
        %v589 = vunpack.c.l.b16 %v579
        %v590 = vpack.c.b16 %v589, %v588
        %592 = vrot.lane.b32.xlu0 %v590, 127
        %v593 = vpop.permute.xlu0 %592
        %v597 = vunpack.c.l.b16 %v584
        %v598 = vunpack.c.l.b16 %v585
        %v599 = vpack.c.b16 %v598, %v597
        %601 = vrot.lane.b32.xlu0 %v599, 127
        %v602 = vpop.permute.xlu0 %601
        %604 = vmatprep.subr.bf16.mxu0 0
        %605 = vmatpush1.bf16.msra.mxu0 0
        %606 = vmatprep.subr.bf16.mxu0 0
        %607 = vmatpush1.bf16.msra.mxu0 0
        %608 = vmatprep.subr.bf16.mxu0 0
        %609 = vmatpush1.bf16.msra.mxu0 0
        %610 = vmatprep.subr.bf16.mxu0 0
        %611 = vmatpush1.bf16.msra.mxu0 0
        %612 = vmatprep.subr.bf16.mxu0 0
        %613 = vmatpush1.bf16.msra.mxu0 %v602
        %614 = vmatprep.subr.bf16.mxu0 0
        %615 = vmatpush1.bf16.msra.mxu0 %v599
        %616 = vmatprep.subr.bf16.mxu0 0
        %617 = vmatpush1.bf16.msra.mxu0 %v593
        %618 = vmatprep.subr.bf16.mxu0 0
        %619 = vmatpush1.bf16.msra.mxu0 %v590
        %620 = vmatprep.subr.bf16.mxu0 0
        %621 = vmatpush2.bf16.msra.mxu0 0
        %622 = vmatprep.subr.bf16.mxu0 0
        %623 = vmatpush2.bf16.msra.mxu0 0
        %624 = vmatprep.subr.bf16.mxu0 0
        %625 = vmatpush2.bf16.msra.mxu0 0
        %626 = vmatprep.subr.bf16.mxu0 0
        %627 = vmatpush2.bf16.msra.mxu0 0
        %628 = vmatprep.subr.bf16.mxu0 0
        %629 = vmatpush2.bf16.msra.mxu0 0
        %630 = vmatprep.subr.bf16.mxu0 0
        %631 = vmatpush2.bf16.msra.mxu0 0
        %632 = vmatprep.subr.bf16.mxu0 0
        %633 = vmatpush2.bf16.msra.mxu0 0
        %634 = vmatprep.subr.bf16.mxu0 0
        %635 = vmatpush2.bf16.msra.mxu0 0
        %636 = vmatprep.mubr.bf16.mxu0 0
        %637 = vmatmul.mubr.bf16.gmra.mxu0 %v221
        %v638 = vpop.f32.mrf.mxu0
        %v639 = vadd.f32 0.0, %v638
        %v640 = vpop.f32.mrf.mxu0
        %v641 = vpop.f32.mrf.mxu0
        %v642 = vpop.f32.mrf.mxu0
        %643 = vdwg.mxu0
        %s644 = smul.u32 %s504, 8
        %s645 = scalar_lea.vmem %s170, %s644 [#allocation4]
        %646 = vst.msk [vmem:[%s645] sm:$0xff] %vm265, %v639
        %v647 = vld [vmem:[#allocation2] sm:$0xff]
        %v648 = vadd.f32 %v647, %v639
        %649 = vst.msk [vmem:[#allocation2] sm:$0xff] %vm265, %v648
        %v650 = vld [vmem:[#allocation3] sm:$0xff]
        %v651 = vmul.f32 %v639, %v639
        %v652 = vadd.f32 %v650, %v651
        %653 = vst.msk [vmem:[#allocation3] sm:$0xff] %vm265, %v652
        %v654 = vld [vmem:[%s583] sm:$0xf]
        %v655 = vld [vmem:[%s583 + $0x4] sm:$0xf]
        %s656 = sadd.s32 %s189, 7
        %s657 = smul.u32 %s656, 2
        %s658 = smul.addr %s657, 4
        %s659 = scalar_lea.vmem %s175, %s658
        %v660 = vld [vmem:[%s659] sm:$0xf]
        %v661 = vld [vmem:[%s659 + $0x4] sm:$0xf]
        %v664 = vunpack.c.l.b16 %v654
        %v665 = vunpack.c.l.b16 %v655
        %v666 = vpack.c.b16 %v665, %v664
        %668 = vrot.lane.b32.xlu0 %v666, 127
        %v669 = vpop.permute.xlu0 %668
        %v673 = vunpack.c.l.b16 %v660
        %v674 = vunpack.c.l.b16 %v661
        %v675 = vpack.c.b16 %v674, %v673
        %677 = vrot.lane.b32.xlu0 %v675, 127
        %v678 = vpop.permute.xlu0 %677
        %680 = vmatprep.subr.bf16.mxu0 0
        %681 = vmatpush1.bf16.msra.mxu0 0
        %682 = vmatprep.subr.bf16.mxu0 0
        %683 = vmatpush1.bf16.msra.mxu0 0
        %684 = vmatprep.subr.bf16.mxu0 0
        %685 = vmatpush1.bf16.msra.mxu0 0
        %686 = vmatprep.subr.bf16.mxu0 0
        %687 = vmatpush1.bf16.msra.mxu0 0
        %688 = vmatprep.subr.bf16.mxu0 0
        %689 = vmatpush1.bf16.msra.mxu0 %v678
        %690 = vmatprep.subr.bf16.mxu0 0
        %691 = vmatpush1.bf16.msra.mxu0 %v675
        %692 = vmatprep.subr.bf16.mxu0 0
        %693 = vmatpush1.bf16.msra.mxu0 %v669
        %694 = vmatprep.subr.bf16.mxu0 0
        %695 = vmatpush1.bf16.msra.mxu0 %v666
        %696 = vmatprep.subr.bf16.mxu0 0
        %697 = vmatpush2.bf16.msra.mxu0 0
        %698 = vmatprep.subr.bf16.mxu0 0
        %699 = vmatpush2.bf16.msra.mxu0 0
        %700 = vmatprep.subr.bf16.mxu0 0
        %701 = vmatpush2.bf16.msra.mxu0 0
        %702 = vmatprep.subr.bf16.mxu0 0
        %703 = vmatpush2.bf16.msra.mxu0 0
        %704 = vmatprep.subr.bf16.mxu0 0
        %705 = vmatpush2.bf16.msra.mxu0 0
        %706 = vmatprep.subr.bf16.mxu0 0
        %707 = vmatpush2.bf16.msra.mxu0 0
        %708 = vmatprep.subr.bf16.mxu0 0
        %709 = vmatpush2.bf16.msra.mxu0 0
        %710 = vmatprep.subr.bf16.mxu0 0
        %711 = vmatpush2.bf16.msra.mxu0 0
        %712 = vmatprep.mubr.bf16.mxu0 0
        %713 = vmatmul.mubr.bf16.gmra.mxu0 %v221
        %v714 = vpop.f32.mrf.mxu0
        %v715 = vadd.f32 0.0, %v714
        %v716 = vpop.f32.mrf.mxu0
        %v717 = vpop.f32.mrf.mxu0
        %v718 = vpop.f32.mrf.mxu0
        %719 = vdwg.mxu0
        %s720 = smul.u32 %s580, 8
        %s721 = scalar_lea.vmem %s170, %s720 [#allocation4]
        %722 = vst.msk [vmem:[%s721] sm:$0xff] %vm265, %v715
        %v723 = vld [vmem:[#allocation2] sm:$0xff]
        %v724 = vadd.f32 %v723, %v715
        %725 = vst.msk [vmem:[#allocation2] sm:$0xff] %vm265, %v724
        %v726 = vld [vmem:[#allocation3] sm:$0xff]
        %v727 = vmul.f32 %v715, %v715
        %v728 = vadd.f32 %v726, %v727
        %729 = vst.msk [vmem:[#allocation3] sm:$0xff] %vm265, %v728
        %v730 = vld [vmem:[%s659] sm:$0xf]
        %v731 = vld [vmem:[%s659 + $0x4] sm:$0xf]
        %s732 = sadd.s32 %s189, 8
        %s733 = smul.u32 %s732, 2
        %s734 = smul.addr %s733, 4
        %s735 = scalar_lea.vmem %s175, %s734
        %v736 = vld [vmem:[%s735] sm:$0xf]
        %v737 = vld [vmem:[%s735 + $0x4] sm:$0xf]
        %v740 = vunpack.c.l.b16 %v730
        %v741 = vunpack.c.l.b16 %v731
        %v742 = vpack.c.b16 %v741, %v740
        %744 = vrot.lane.b32.xlu0 %v742, 127
        %v745 = vpop.permute.xlu0 %744
        %v749 = vunpack.c.l.b16 %v736
        %v750 = vunpack.c.l.b16 %v737
        %v751 = vpack.c.b16 %v750, %v749
        %753 = vrot.lane.b32.xlu0 %v751, 127
        %v754 = vpop.permute.xlu0 %753
        %756 = vmatprep.subr.bf16.mxu0 0
        %757 = vmatpush1.bf16.msra.mxu0 0
        %758 = vmatprep.subr.bf16.mxu0 0
        %759 = vmatpush1.bf16.msra.mxu0 0
        %760 = vmatprep.subr.bf16.mxu0 0
        %761 = vmatpush1.bf16.msra.mxu0 0
        %762 = vmatprep.subr.bf16.mxu0 0
        %763 = vmatpush1.bf16.msra.mxu0 0
        %764 = vmatprep.subr.bf16.mxu0 0
        %765 = vmatpush1.bf16.msra.mxu0 %v754
        %766 = vmatprep.subr.bf16.mxu0 0
        %767 = vmatpush1.bf16.msra.mxu0 %v751
        %768 = vmatprep.subr.bf16.mxu0 0
        %769 = vmatpush1.bf16.msra.mxu0 %v745
        %770 = vmatprep.subr.bf16.mxu0 0
        %771 = vmatpush1.bf16.msra.mxu0 %v742
        %772 = vmatprep.subr.bf16.mxu0 0
        %773 = vmatpush2.bf16.msra.mxu0 0
        %774 = vmatprep.subr.bf16.mxu0 0
        %775 = vmatpush2.bf16.msra.mxu0 0
        %776 = vmatprep.subr.bf16.mxu0 0
        %777 = vmatpush2.bf16.msra.mxu0 0
        %778 = vmatprep.subr.bf16.mxu0 0
        %779 = vmatpush2.bf16.msra.mxu0 0
        %780 = vmatprep.subr.bf16.mxu0 0
        %781 = vmatpush2.bf16.msra.mxu0 0
        %782 = vmatprep.subr.bf16.mxu0 0
        %783 = vmatpush2.bf16.msra.mxu0 0
        %784 = vmatprep.subr.bf16.mxu0 0
        %785 = vmatpush2.bf16.msra.mxu0 0
        %786 = vmatprep.subr.bf16.mxu0 0
        %787 = vmatpush2.bf16.msra.mxu0 0
        %788 = vmatprep.mubr.bf16.mxu0 0
        %789 = vmatmul.mubr.bf16.gmra.mxu0 %v221
        %v790 = vpop.f32.mrf.mxu0
        %v791 = vadd.f32 0.0, %v790
        %v792 = vpop.f32.mrf.mxu0
        %v793 = vpop.f32.mrf.mxu0
        %v794 = vpop.f32.mrf.mxu0
        %795 = vdwg.mxu0
        %s796 = smul.u32 %s656, 8
        %s797 = scalar_lea.vmem %s170, %s796 [#allocation4]
        %798 = vst.msk [vmem:[%s797] sm:$0xff] %vm265, %v791
        %v799 = vld [vmem:[#allocation2] sm:$0xff]
        %v800 = vadd.f32 %v799, %v791
        %801 = vst.msk [vmem:[#allocation2] sm:$0xff] %vm265, %v800
        %v802 = vld [vmem:[#allocation3] sm:$0xff]
        %v803 = vmul.f32 %v791, %v791
        %v804 = vadd.f32 %v802, %v803
        %805 = vst.msk [vmem:[#allocation3] sm:$0xff] %vm265, %v804
        // Predicated region
        $region33: #{tpu_custom_call.1} parent=27 // pred_check
          %p806 = pneg %p181
        $region34: #{tpu_custom_call.1} parent=27 // pred_check_branch
          %808 = sbr.rel (%p806) target = $region36
        $region35: #{tpu_custom_call.1} parent=27 // pred_region
          %v809 = vld [vmem:[#allocation2] sm:$0xff]
          %v810 = vsel %vm265, %v809, 0.0
          %811 = vadd.xlane.f32.xlu0 %v810
          %v812 = vpop.xlane.xlu0 %811
          %v813 = vld [vmem:[#allocation3] sm:$0xff]
          %v814 = vsel %vm265, %v813, 0.0
          %815 = vadd.xlane.f32.xlu0 %v814
          %v816 = vpop.xlane.xlu0 %815
          %v817 = vmul.f32 %v812, 0.015625
          %v818 = vmul.f32 %v816, 0.015625
          %v819 = vmul.f32 %v817, %v817
          %v820 = vsub.f32 %v818, %v819
          %v821 = vmax.f32 %v820, 0.0
          %v822 = vadd.f32 %v821, 1e-05
          %v823 = vrsqrt.pop %v822
          %v824 = vld [vmem:[%s170] sm:$0xff]
          %v825 = vld [vmem:[%s170 + $0x8] sm:$0xff]
          %v826 = vld [vmem:[%s170 + $0x10] sm:$0xff]
          %v827 = vld [vmem:[%s170 + $0x18] sm:$0xff]
          %v828 = vld [vmem:[%s170 + $0x20] sm:$0xff]
          %v829 = vld [vmem:[%s170 + $0x28] sm:$0xff]
          %v830 = vld [vmem:[%s170 + $0x30] sm:$0xff]
          %v831 = vld [vmem:[%s170 + $0x38] sm:$0xff]
          %v832 = vsub.f32 %v824, %v817
          %v833 = vsub.f32 %v825, %v817
          %v834 = vsub.f32 %v826, %v817
          %v835 = vsub.f32 %v827, %v817
          %v836 = vsub.f32 %v828, %v817
          %v837 = vsub.f32 %v829, %v817
          %v838 = vsub.f32 %v830, %v817
          %v839 = vsub.f32 %v831, %v817
          %v840 = vmul.f32 %v832, %v823
          %v841 = vmul.f32 %v833, %v823
          %v842 = vmul.f32 %v834, %v823
          %v843 = vmul.f32 %v835, %v823
          %v844 = vmul.f32 %v836, %v823
          %v845 = vmul.f32 %v837, %v823
          %v846 = vmul.f32 %v838, %v823
          %v847 = vmul.f32 %v839, %v823
          %v848 = vmax.f32 %v840, 0.0
          %v849 = vmax.f32 %v841, 0.0
          %v850 = vmax.f32 %v842, 0.0
          %v851 = vmax.f32 %v843, 0.0
          %v852 = vmax.f32 %v844, 0.0
          %v853 = vmax.f32 %v845, 0.0
          %v854 = vmax.f32 %v846, 0.0
          %v855 = vmax.f32 %v847, 0.0
          %856 = vst.msk [vmem:[%s170] sm:$0xff] %vm265, %v848
          %857 = vst.msk [vmem:[%s170 + $0x8] sm:$0xff] %vm265, %v849
          %858 = vst.msk [vmem:[%s170 + $0x10] sm:$0xff] %vm265, %v850
          %859 = vst.msk [vmem:[%s170 + $0x18] sm:$0xff] %vm265, %v851
          %860 = vst.msk [vmem:[%s170 + $0x20] sm:$0xff] %vm265, %v852
          %861 = vst.msk [vmem:[%s170 + $0x28] sm:$0xff] %vm265, %v853
          %862 = vst.msk [vmem:[%s170 + $0x30] sm:$0xff] %vm265, %v854
          %863 = vst.msk [vmem:[%s170 + $0x38] sm:$0xff] %vm265, %v855
        $region36: #{tpu_custom_call.1} parent=27 // pred_fallthru
          _
        %s864 = sand.u32 %s97, 1
        %s865 = scalar_lea.sflag [#allocation5], %s864
        %s866 = sand.u32 %s97, 1
        %s867 = smul.addr %s866, 64
        %s868 = scalar_lea.vmem [#allocation4], %s867
        // Predicated region
        $region37: #{tpu_custom_call.1} parent=27 // pred_check
          %p869 = pneg %p107
        $region38: #{tpu_custom_call.1} parent=27 // pred_check_branch
          %871 = sbr.rel (%p869) target = $region40
        $region39: #{tpu_custom_call.1} parent=27 // pred_region
          %s873 = ssub.s32 1024, 1024
          %874 = vsyncadd %s865, %s873
          %s875 = smul.addr %s21, 8
          %s876 = sadd.s32 %s22, %s875
          %s877 = smul.addr %s876, 128
          %s878 = scalar_lea.hbm %s2, %s877
          %s879 = sshll.u32 %s868, 4
          %s880 = int_to_ptr.vmem [resolvable:$true] %s879
          %885 = dma.vmem_to_hbm [thread:$0]  %s880, 1024, %s878, %s865, 128, 128, 8
        $region40: #{tpu_custom_call.1} parent=27 // pred_fallthru
          _
      $region28: #{tpu_custom_call.1} parent=5 // pred_fallthru
        _
      %p886 = scmp.le.s32.totalorder 2, %s11
      // Predicated region
      $region41: #{tpu_custom_call.1} parent=5 // pred_check
        %p887 = pneg %p886
      $region42: #{tpu_custom_call.1} parent=5 // pred_check_branch
        %889 = sbr.rel (%p887) target = $region44
      $region43: #{tpu_custom_call.1} parent=5 // pred_region
        %s890 = ssub.s32 %s11, 2
        // Predicated region
        $region45: #{tpu_custom_call.1} parent=43 // pred_check
          %p891 = pneg %p113
        $region46: #{tpu_custom_call.1} parent=43 // pred_check_branch
          %893 = sbr.rel (%p891) target = $region48
        $region47: #{tpu_custom_call.1} parent=43 // pred_region
          %s894 = sand.u32 %s98, 1
          %s895 = scalar_lea.sflag [#allocation5], %s894
          %s896 = sand.u32 %s98, 1
          %s897 = smul.addr %s896, 64
          %s898 = scalar_lea.vmem [#allocation4], %s897
          %899 = dma.done %s895, 1024
        $region48: #{tpu_custom_call.1} parent=43 // pred_fallthru
          _
      $region44: #{tpu_custom_call.1} parent=5 // pred_fallthru
        _
    $region6: #{tpu_custom_call.1} parent=1 // loop_footer
      %s15 = sadd.s32 1, %s11
    $region7: #{tpu_custom_call.1} parent=1 // loop_footer_branch
      %10 = sbr.rel target = $region3
    $region8: #{tpu_custom_call.1} parent=1 // loop_exit
      _
    %900 = vsyncpa [#allocation5], 1
    %s901 = scalar_lea.sflag [#allocation5], 1
    %902 = vsyncpa %s901, 1

</llo_original>
